<compile_context>
chip_gen: v7x
topology: tpu7x:2x2x1
jax: 0.10.0
libtpu: 0.0.40
codegen_flags: <defaults>
</compile_context>

<pallas_src>
import functools

import jax
import jax.numpy as jnp
from jax import lax
from jax.experimental import pallas as pl
from jax.experimental.pallas import tpu as pltpu

_SUBLANE = 8      # f32 sublane count: batch dim padded to a multiple of this
_LANE = 128       # lane width: output projection padded to a multiple of this
_UNROLL_T = 16    # fully unroll the recurrence for T <= this, rolled fori_loop otherwise


def _round_up(x, m):
    return ((x + m - 1) // m) * m


def critic_kernel(x_ref,      # (T*Bp, Din)   time-major, batch-padded input (f32)
                  wx_ref,     # (Din, 4H)     folded input->gate weights   (f32 or bf16)
                  bx_ref,     # (1, 4H)       folded bias (f32)
                  whh_ref,    # (H, 4H)       recurrent weights            (f32 or bf16)
                  wout_ref,   # (H, Dout_p)   output projection, lane-padded
                  bout_ref,   # (1, Dout_p)
                  y_ref,      # (T*Bp, Dout_p) time-major output (f32)
                  hT_ref,     # (Bp, H)       final hidden (f32)
                  cT_ref,     # (Bp, H)       final cell   (f32)
                  gx_ref,     # VMEM scratch (T*Bp, 4H) f32: per-step gate input term
                  hall_ref):  # VMEM scratch (T*Bp, H)  f32: per-step hidden states
    Bp, H = hT_ref.shape
    T = x_ref.shape[0] // Bp
    mm_dtype = wx_ref.dtype   # matmul feed dtype (f32 or bf16); accumulation stays f32

    # ---- Prologue: ONE batched matmul for every timestep's input->gate contribution. ----
    gx_ref[...] = (
        jnp.dot(x_ref[...].astype(mm_dtype), wx_ref[...],
                preferred_element_type=jnp.float32)
        + bx_ref[...])

    whh = whh_ref[...]

    def step(t, carry):
        h, c = carry
        off = t * Bp
        if not isinstance(off, int):                     # rolled-loop path: hint alignment
            off = pl.multiple_of(off, _SUBLANE)
        gates = gx_ref[pl.ds(off, Bp), :] + jnp.dot(
            h.astype(mm_dtype), whh, preferred_element_type=jnp.float32)   # (Bp, 4H)
        # sigmoid/tanh over the full lane-dense 4H vector (EUP), then slice gates.
        # (H=32 gate slices sit at lane offsets 0/32/64/96 -> accepted XLU rotates; with
        #  H a multiple of 128 they would be full vregs.)
        sg = jax.nn.sigmoid(gates)
        tg = jnp.tanh(gates)
        c = sg[:, H:2 * H] * c + sg[:, 0:H] * tg[:, 2 * H:3 * H]   # f*c + i*g
        h = sg[:, 3 * H:4 * H] * jnp.tanh(c)                       # o*tanh(c)
        # Aligned (8, H) scratch write; hidden under the next step's MXU work and
        # bounds live ranges (no list+concatenate vreg blowup).
        hall_ref[pl.ds(off, Bp), :] = h
        return (h, c)

    h0 = jnp.zeros((Bp, H), jnp.float32)
    c0 = jnp.zeros((Bp, H), jnp.float32)
    if T <= _UNROLL_T:
        carry = (h0, c0)
        for t in range(T):                 # static unroll for short sequences
            carry = step(t, carry)
        hT, cT = carry
    else:
        hT, cT = lax.fori_loop(0, T, step, (h0, c0))   # rolled, robust for long T

    # ---- Epilogue: ONE batched output projection over every timestep (lane-dense store). ----
    y = jnp.dot(hall_ref[...].astype(mm_dtype), wout_ref[...],
                preferred_element_type=jnp.float32) + bout_ref[...]
    y_ref[...] = y.astype(y_ref.dtype)
    hT_ref[...] = hT.astype(hT_ref.dtype)
    cT_ref[...] = cT.astype(cT_ref.dtype)


def prepare_critic_params(params, matmul_dtype=jnp.float32):
    """One-time parameter prep, hoisted out of the per-call forward.

    Folds the embedding Linear and both LSTM biases into the input->gate path (exact in real
    arithmetic), pads the output projection to a lane-dense (multiple of 128) width, and casts
    matmul operands to `matmul_dtype` (bf16 is the v6e/v7x MXU lever; biases stay f32).
    Returns (prepped_tuple, real_output_dim).
    """
    w_in, b_in, w_ih, b_ih, w_hh, b_hh, w_out, b_out = params
    H, Dout = w_out.shape
    w_x = jnp.dot(w_in, w_ih)                     # (Din, 4H)
    b_x = jnp.dot(b_in, w_ih) + b_ih + b_hh       # (1, 4H)
    Dout_p = _round_up(Dout, _LANE)
    w_out_p = jnp.zeros((H, Dout_p), jnp.float32).at[:, :Dout].set(w_out)
    b_out_p = jnp.zeros((1, Dout_p), jnp.float32).at[:, :Dout].set(b_out)
    prepped = (w_x.astype(matmul_dtype),
               b_x.astype(jnp.float32),
               w_hh.astype(matmul_dtype),
               w_out_p.astype(matmul_dtype),
               b_out_p.astype(jnp.float32))
    return prepped, Dout


@functools.partial(jax.jit, static_argnames=("dout",))
def critic_forward(x, prepped, dout):
    """x: (B, T, input_dim) f32. Returns (encoding (B,T,dout), hidden (1,B,H), cell (1,B,H))."""
    w_x, b_x, w_hh, w_out_p, b_out_p = prepped
    B, T, Din = x.shape
    H = w_hh.shape[0]
    Dout_p = w_out_p.shape[1]
    Bp = _round_up(B, _SUBLANE)
    tb = T * Bp

    # Time-major, batch padded to the 8-row sublane tile; padded rows are zero and never read back.
    x_tm = jnp.zeros((T, Bp, Din), jnp.float32).at[:, :B, :].set(
        jnp.transpose(x, (1, 0, 2))).reshape(tb, Din)

    # Size the VMEM limit from the actual resident footprint (no grid -> no double buffering),
    # with 2x headroom; keeps the kernel portable to v7x's smaller VMEM.
    mm_bytes = jnp.dtype(w_x.dtype).itemsize
    footprint = (tb * Din * 4                                   # x_tm
                 + Din * 4 * H * mm_bytes + 4 * H * 4           # w_x, b_x
                 + H * 4 * H * mm_bytes                         # w_hh
                 + H * Dout_p * mm_bytes + Dout_p * 4           # w_out, b_out
                 + tb * Dout_p * 4 + 2 * Bp * H * 4             # y, hT, cT
                 + tb * 4 * H * 4 + tb * H * 4)                 # gx, h_all scratch
    vmem_limit = int(min(100 * 2**20, max(4 * 2**20, 2 * footprint + 2**20)))

    vmem = pl.BlockSpec(memory_space=pltpu.MemorySpace.VMEM)
    y_tm, hT, cT = pl.pallas_call(
        critic_kernel,
        out_shape=(
            jax.ShapeDtypeStruct((tb, Dout_p), jnp.float32),
            jax.ShapeDtypeStruct((Bp, H), jnp.float32),
            jax.ShapeDtypeStruct((Bp, H), jnp.float32),
        ),
        in_specs=[vmem] * 6,
        out_specs=(vmem, vmem, vmem),
        scratch_shapes=[
            pltpu.VMEM((tb, 4 * H), jnp.float32),   # gx: all timesteps' gate input term
            pltpu.VMEM((tb, H), jnp.float32),       # h_all: per-step hidden states
        ],
        compiler_params=pltpu.CompilerParams(vmem_limit_bytes=vmem_limit),
    )(x_tm, w_x, b_x, w_hh, w_out_p, b_out_p)

    # Back to batch-major, drop batch/lane padding.
    y = jnp.transpose(y_tm.reshape(T, Bp, Dout_p), (1, 0, 2))[:B, :, :dout]
    # PyTorch LSTM returns hidden/cell shaped (num_layers=1, B, H).
    return y, hT[None, :B, :], cT[None, :B, :]


def critic_reference(x, params):
    """Pure-JAX reference with the exact original (unfolded) formulation."""
    w_in, b_in, w_ih, b_ih, w_hh, b_hh, w_out, b_out = params
    B, T, Din = x.shape
    H = w_hh.shape[0]
    e = x @ w_in + b_in                                       # (B, T, E)

    def step(carry, et):                                      # et: (B, E)
        h, c = carry
        gates = et @ w_ih + b_ih + h @ w_hh + b_hh
        i = jax.nn.sigmoid(gates[:, 0:H])
        f = jax.nn.sigmoid(gates[:, H:2 * H])
        g = jnp.tanh(gates[:, 2 * H:3 * H])
        o = jax.nn.sigmoid(gates[:, 3 * H:4 * H])
        c = f * c + i * g
        h = o * jnp.tanh(c)
        return (h, c), h

    h0 = jnp.zeros((B, H), jnp.float32)
    c0 = jnp.zeros((B, H), jnp.float32)
    (hT, cT), hs = jax.lax.scan(step, (h0, c0), jnp.transpose(e, (1, 0, 2)))
    outs = jnp.transpose(hs, (1, 0, 2))                       # (B, T, H)
    y = outs @ w_out + b_out
    return y, hT[None, :, :], cT[None, :, :]


def init_params(key, input_dim, embed_dim, hid_dim, output_dim):
    ks = jax.random.split(key, 6)
    s_lstm = 1.0 / jnp.sqrt(hid_dim)
    # layer_init(..., 0.001): small deterministic init for the Linear layers.
    w_in = jax.random.uniform(ks[0], (input_dim, embed_dim), jnp.float32, -0.001, 0.001)
    b_in = jnp.zeros((1, embed_dim), jnp.float32)
    w_ih = jax.random.uniform(ks[1], (embed_dim, 4 * hid_dim), jnp.float32, -s_lstm, s_lstm)
    b_ih = jax.random.uniform(ks[2], (1, 4 * hid_dim), jnp.float32, -s_lstm, s_lstm)
    w_hh = jax.random.uniform(ks[3], (hid_dim, 4 * hid_dim), jnp.float32, -s_lstm, s_lstm)
    b_hh = jax.random.uniform(ks[4], (1, 4 * hid_dim), jnp.float32, -s_lstm, s_lstm)
    w_out = jax.random.uniform(ks[5], (hid_dim, output_dim), jnp.float32, -0.001, 0.001)
    b_out = jnp.zeros((1, output_dim), jnp.float32)
    return (w_in, b_in, w_ih, b_ih, w_hh, b_hh, w_out, b_out)


if __name__ == "__main__":
    B, T = 2, 8
    input_dim, embed_dim, hid_dim, output_dim = 4, 32, 32, 16

    key = jax.random.PRNGKey(0)
    k_x, k_p, k_x2 = jax.random.split(key, 3)
    x = jax.random.normal(k_x, (B, T, input_dim), jnp.float32)
    params = init_params(k_p, input_dim, embed_dim, hid_dim, output_dim)

    # Parameter folding hoisted: done once, reused for every forward call.
    prepped_f32, dout = prepare_critic_params(params, jnp.float32)

    encoding, hidden, cell = critic_forward(x, prepped_f32, dout)
    jax.block_until_ready((encoding, hidden, cell))

    assert encoding.shape == (B, T, output_dim)
    assert hidden.shape == (1, B, hid_dim)
    assert cell.shape == (1, B, hid_dim)

    # Numerical check vs the unfolded pure-JAX reference (unrolled recurrence path).
    y_ref, h_ref, c_ref = critic_reference(x, params)
    assert jnp.allclose(encoding, y_ref, rtol=1e-4, atol=1e-4)
    assert jnp.allclose(hidden, h_ref, rtol=1e-4, atol=1e-4)
    assert jnp.allclose(cell, c_ref, rtol=1e-4, atol=1e-4)

    # Exercise the rolled-loop path (T > _UNROLL_T) as well.
    T_long = 40
    x_long = jax.random.normal(k_x2, (B, T_long, input_dim), jnp.float32)
    y_l, h_l, c_l = critic_forward(x_long, prepped_f32, dout)
    jax.block_until_ready((y_l, h_l, c_l))
    y_lr, h_lr, c_lr = critic_reference(x_long, params)
    assert jnp.allclose(y_l, y_lr, rtol=1e-4, atol=1e-4)
    assert jnp.allclose(h_l, h_lr, rtol=1e-4, atol=1e-4)
    assert jnp.allclose(c_l, c_lr, rtol=1e-4, atol=1e-4)

    # bf16 MXU-feed variant (v6e/v7x throughput lever; state & elementwise math remain f32).
    prepped_bf16, _ = prepare_critic_params(params, jnp.bfloat16)
    y_b, h_b, c_b = critic_forward(x, prepped_bf16, dout)
    jax.block_until_ready((y_b, h_b, c_b))
    assert jnp.allclose(y_b, y_ref, rtol=3e-2, atol=3e-2)
    assert jnp.allclose(h_b, h_ref, rtol=3e-2, atol=3e-2)
    assert jnp.allclose(c_b, c_ref, rtol=3e-2, atol=3e-2)

    print("KERNEL_OK")
</pallas_src>

<mosaic_0001>
module attributes {stable_mosaic.version = 11 : i64} {
  func.func @critic_kernel(%arg0: memref<64x4xf32, #tpu.memory_space<vmem>>, %arg1: memref<4x128xf32, #tpu.memory_space<vmem>>, %arg2: memref<1x128xf32, #tpu.memory_space<vmem>>, %arg3: memref<32x128xf32, #tpu.memory_space<vmem>>, %arg4: memref<32x128xf32, #tpu.memory_space<vmem>>, %arg5: memref<1x128xf32, #tpu.memory_space<vmem>>, %arg6: memref<64x128xf32, #tpu.memory_space<vmem>>, %arg7: memref<8x32xf32, #tpu.memory_space<vmem>>, %arg8: memref<8x32xf32, #tpu.memory_space<vmem>>, %arg9: memref<64x128xf32, #tpu.memory_space<vmem>>, %arg10: memref<64x32xf32, #tpu.memory_space<vmem>>) attributes {dimension_semantics = [], scalar_prefetch = 0 : i64, scratch_operands = 2 : i64, tpu.core_type = #tpu.core_type<tc>} {
    %c0 = arith.constant 0 : index
    %c0_0 = arith.constant 0 : index
    %0 = vector.load %arg0[%c0, %c0_0] : memref<64x4xf32, #tpu.memory_space<vmem>>, vector<64x4xf32>
    %c0_1 = arith.constant 0 : index
    %c0_2 = arith.constant 0 : index
    %1 = vector.load %arg1[%c0_1, %c0_2] : memref<4x128xf32, #tpu.memory_space<vmem>>, vector<4x128xf32>
    %cst = arith.constant dense<0.000000e+00> : vector<64x128xf32>
    %2 = tpu.matmul %0, %1, %cst {dimension_numbers = #tpu.dot_dimension_numbers<[1], [0], [0], [1], [0, 0, 1, 1], [], []>} : vector<64x4xf32>, vector<4x128xf32>, vector<64x128xf32> -> vector<64x128xf32>
    %c0_3 = arith.constant 0 : index
    %c0_4 = arith.constant 0 : index
    %3 = vector.load %arg2[%c0_3, %c0_4] : memref<1x128xf32, #tpu.memory_space<vmem>>, vector<1x128xf32>
    %4 = vector.broadcast %3 : vector<1x128xf32> to vector<64x128xf32>
    %5 = arith.addf %2, %4 : vector<64x128xf32>
    %c0_5 = arith.constant 0 : index
    %c0_6 = arith.constant 0 : index
    %6 = vector.load %arg9[%c0_5, %c0_6] : memref<64x128xf32, #tpu.memory_space<vmem>>, vector<64x128xf32>
    tpu.vector_store %arg9[%c0_5, %c0_6], %5 {strides = array<i32>} : memref<64x128xf32, #tpu.memory_space<vmem>>, vector<64x128xf32>,
    %c0_7 = arith.constant 0 : index
    %c0_8 = arith.constant 0 : index
    %7 = vector.load %arg3[%c0_7, %c0_8] : memref<32x128xf32, #tpu.memory_space<vmem>>, vector<32x128xf32>
    %cst_9 = arith.constant 0.000000e+00 : f32
    %8 = vector.broadcast %cst_9 : f32 to vector<8x32xf32>
    %cst_10 = arith.constant 0.000000e+00 : f32
    %9 = vector.broadcast %cst_10 : f32 to vector<8x32xf32>
    %c0_11 = arith.constant 0 : index
    %c0_12 = arith.constant 0 : index
    %10 = vector.load %arg9[%c0_11, %c0_12] : memref<64x128xf32, #tpu.memory_space<vmem>>, vector<8x128xf32>
    %cst_13 = arith.constant dense<0.000000e+00> : vector<8x128xf32>
    %11 = tpu.matmul %8, %7, %cst_13 {dimension_numbers = #tpu.dot_dimension_numbers<[1], [0], [0], [1], [0, 0, 1, 1], [], []>} : vector<8x32xf32>, vector<32x128xf32>, vector<8x128xf32> -> vector<8x128xf32>
    %12 = arith.addf %10, %11 : vector<8x128xf32>
    %13 = arith.negf %12 : vector<8x128xf32>
    %14 = math.exp %13 : vector<8x128xf32>
    %cst_14 = arith.constant 1.000000e+00 : f32
    %15 = vector.broadcast %cst_14 : f32 to vector<8x128xf32>
    %16 = arith.addf %15, %14 : vector<8x128xf32>
    %17 = arith.divf %15, %16 : vector<8x128xf32>
    %18 = math.tanh %12 : vector<8x128xf32>
    %19 = vector.extract_strided_slice %17 {offsets = [0, 32], sizes = [8, 32], strides = [1, 1]} : vector<8x128xf32> to vector<8x32xf32>
    %20 = arith.mulf %19, %9 : vector<8x32xf32>
    %21 = vector.extract_strided_slice %17 {offsets = [0, 0], sizes = [8, 32], strides = [1, 1]} : vector<8x128xf32> to vector<8x32xf32>
    %22 = vector.extract_strided_slice %18 {offsets = [0, 64], sizes = [8, 32], strides = [1, 1]} : vector<8x128xf32> to vector<8x32xf32>
    %23 = arith.mulf %21, %22 : vector<8x32xf32>
    %24 = arith.addf %20, %23 : vector<8x32xf32>
    %25 = vector.extract_strided_slice %17 {offsets = [0, 96], sizes = [8, 32], strides = [1, 1]} : vector<8x128xf32> to vector<8x32xf32>
    %26 = math.tanh %24 : vector<8x32xf32>
    %27 = arith.mulf %25, %26 : vector<8x32xf32>
    %c0_15 = arith.constant 0 : index
    %c0_16 = arith.constant 0 : index
    %28 = vector.load %arg10[%c0_15, %c0_16] : memref<64x32xf32, #tpu.memory_space<vmem>>, vector<8x32xf32>
    tpu.vector_store %arg10[%c0_15, %c0_16], %27 {strides = array<i32>} : memref<64x32xf32, #tpu.memory_space<vmem>>, vector<8x32xf32>,
    %c8 = arith.constant 8 : index
    %c0_17 = arith.constant 0 : index
    %29 = vector.load %arg9[%c8, %c0_17] : memref<64x128xf32, #tpu.memory_space<vmem>>, vector<8x128xf32>
    %cst_18 = arith.constant dense<0.000000e+00> : vector<8x128xf32>
    %30 = tpu.matmul %27, %7, %cst_18 {dimension_numbers = #tpu.dot_dimension_numbers<[1], [0], [0], [1], [0, 0, 1, 1], [], []>} : vector<8x32xf32>, vector<32x128xf32>, vector<8x128xf32> -> vector<8x128xf32>
    %31 = arith.addf %29, %30 : vector<8x128xf32>
    %32 = arith.negf %31 : vector<8x128xf32>
    %33 = math.exp %32 : vector<8x128xf32>
    %cst_19 = arith.constant 1.000000e+00 : f32
    %34 = vector.broadcast %cst_19 : f32 to vector<8x128xf32>
    %35 = arith.addf %34, %33 : vector<8x128xf32>
    %36 = arith.divf %34, %35 : vector<8x128xf32>
    %37 = math.tanh %31 : vector<8x128xf32>
    %38 = vector.extract_strided_slice %36 {offsets = [0, 32], sizes = [8, 32], strides = [1, 1]} : vector<8x128xf32> to vector<8x32xf32>
    %39 = arith.mulf %38, %24 : vector<8x32xf32>
    %40 = vector.extract_strided_slice %36 {offsets = [0, 0], sizes = [8, 32], strides = [1, 1]} : vector<8x128xf32> to vector<8x32xf32>
    %41 = vector.extract_strided_slice %37 {offsets = [0, 64], sizes = [8, 32], strides = [1, 1]} : vector<8x128xf32> to vector<8x32xf32>
    %42 = arith.mulf %40, %41 : vector<8x32xf32>
    %43 = arith.addf %39, %42 : vector<8x32xf32>
    %44 = vector.extract_strided_slice %36 {offsets = [0, 96], sizes = [8, 32], strides = [1, 1]} : vector<8x128xf32> to vector<8x32xf32>
    %45 = math.tanh %43 : vector<8x32xf32>
    %46 = arith.mulf %44, %45 : vector<8x32xf32>
    %c8_20 = arith.constant 8 : index
    %c0_21 = arith.constant 0 : index
    %47 = vector.load %arg10[%c8_20, %c0_21] : memref<64x32xf32, #tpu.memory_space<vmem>>, vector<8x32xf32>
    tpu.vector_store %arg10[%c8_20, %c0_21], %46 {strides = array<i32>} : memref<64x32xf32, #tpu.memory_space<vmem>>, vector<8x32xf32>,
    %c16 = arith.constant 16 : index
    %c0_22 = arith.constant 0 : index
    %48 = vector.load %arg9[%c16, %c0_22] : memref<64x128xf32, #tpu.memory_space<vmem>>, vector<8x128xf32>
    %cst_23 = arith.constant dense<0.000000e+00> : vector<8x128xf32>
    %49 = tpu.matmul %46, %7, %cst_23 {dimension_numbers = #tpu.dot_dimension_numbers<[1], [0], [0], [1], [0, 0, 1, 1], [], []>} : vector<8x32xf32>, vector<32x128xf32>, vector<8x128xf32> -> vector<8x128xf32>
    %50 = arith.addf %48, %49 : vector<8x128xf32>
    %51 = arith.negf %50 : vector<8x128xf32>
    %52 = math.exp %51 : vector<8x128xf32>
    %cst_24 = arith.constant 1.000000e+00 : f32
    %53 = vector.broadcast %cst_24 : f32 to vector<8x128xf32>
    %54 = arith.addf %53, %52 : vector<8x128xf32>
    %55 = arith.divf %53, %54 : vector<8x128xf32>
    %56 = math.tanh %50 : vector<8x128xf32>
    %57 = vector.extract_strided_slice %55 {offsets = [0, 32], sizes = [8, 32], strides = [1, 1]} : vector<8x128xf32> to vector<8x32xf32>
    %58 = arith.mulf %57, %43 : vector<8x32xf32>
    %59 = vector.extract_strided_slice %55 {offsets = [0, 0], sizes = [8, 32], strides = [1, 1]} : vector<8x128xf32> to vector<8x32xf32>
    %60 = vector.extract_strided_slice %56 {offsets = [0, 64], sizes = [8, 32], strides = [1, 1]} : vector<8x128xf32> to vector<8x32xf32>
    %61 = arith.mulf %59, %60 : vector<8x32xf32>
    %62 = arith.addf %58, %61 : vector<8x32xf32>
    %63 = vector.extract_strided_slice %55 {offsets = [0, 96], sizes = [8, 32], strides = [1, 1]} : vector<8x128xf32> to vector<8x32xf32>
    %64 = math.tanh %62 : vector<8x32xf32>
    %65 = arith.mulf %63, %64 : vector<8x32xf32>
    %c16_25 = arith.constant 16 : index
    %c0_26 = arith.constant 0 : index
    %66 = vector.load %arg10[%c16_25, %c0_26] : memref<64x32xf32, #tpu.memory_space<vmem>>, vector<8x32xf32>
    tpu.vector_store %arg10[%c16_25, %c0_26], %65 {strides = array<i32>} : memref<64x32xf32, #tpu.memory_space<vmem>>, vector<8x32xf32>,
    %c24 = arith.constant 24 : index
    %c0_27 = arith.constant 0 : index
    %67 = vector.load %arg9[%c24, %c0_27] : memref<64x128xf32, #tpu.memory_space<vmem>>, vector<8x128xf32>
    %cst_28 = arith.constant dense<0.000000e+00> : vector<8x128xf32>
    %68 = tpu.matmul %65, %7, %cst_28 {dimension_numbers = #tpu.dot_dimension_numbers<[1], [0], [0], [1], [0, 0, 1, 1], [], []>} : vector<8x32xf32>, vector<32x128xf32>, vector<8x128xf32> -> vector<8x128xf32>
    %69 = arith.addf %67, %68 : vector<8x128xf32>
    %70 = arith.negf %69 : vector<8x128xf32>
    %71 = math.exp %70 : vector<8x128xf32>
    %cst_29 = arith.constant 1.000000e+00 : f32
    %72 = vector.broadcast %cst_29 : f32 to vector<8x128xf32>
    %73 = arith.addf %72, %71 : vector<8x128xf32>
    %74 = arith.divf %72, %73 : vector<8x128xf32>
    %75 = math.tanh %69 : vector<8x128xf32>
    %76 = vector.extract_strided_slice %74 {offsets = [0, 32], sizes = [8, 32], strides = [1, 1]} : vector<8x128xf32> to vector<8x32xf32>
    %77 = arith.mulf %76, %62 : vector<8x32xf32>
    %78 = vector.extract_strided_slice %74 {offsets = [0, 0], sizes = [8, 32], strides = [1, 1]} : vector<8x128xf32> to vector<8x32xf32>
    %79 = vector.extract_strided_slice %75 {offsets = [0, 64], sizes = [8, 32], strides = [1, 1]} : vector<8x128xf32> to vector<8x32xf32>
    %80 = arith.mulf %78, %79 : vector<8x32xf32>
    %81 = arith.addf %77, %80 : vector<8x32xf32>
    %82 = vector.extract_strided_slice %74 {offsets = [0, 96], sizes = [8, 32], strides = [1, 1]} : vector<8x128xf32> to vector<8x32xf32>
    %83 = math.tanh %81 : vector<8x32xf32>
    %84 = arith.mulf %82, %83 : vector<8x32xf32>
    %c24_30 = arith.constant 24 : index
    %c0_31 = arith.constant 0 : index
    %85 = vector.load %arg10[%c24_30, %c0_31] : memref<64x32xf32, #tpu.memory_space<vmem>>, vector<8x32xf32>
    tpu.vector_store %arg10[%c24_30, %c0_31], %84 {strides = array<i32>} : memref<64x32xf32, #tpu.memory_space<vmem>>, vector<8x32xf32>,
    %c32 = arith.constant 32 : index
    %c0_32 = arith.constant 0 : index
    %86 = vector.load %arg9[%c32, %c0_32] : memref<64x128xf32, #tpu.memory_space<vmem>>, vector<8x128xf32>
    %cst_33 = arith.constant dense<0.000000e+00> : vector<8x128xf32>
    %87 = tpu.matmul %84, %7, %cst_33 {dimension_numbers = #tpu.dot_dimension_numbers<[1], [0], [0], [1], [0, 0, 1, 1], [], []>} : vector<8x32xf32>, vector<32x128xf32>, vector<8x128xf32> -> vector<8x128xf32>
    %88 = arith.addf %86, %87 : vector<8x128xf32>
    %89 = arith.negf %88 : vector<8x128xf32>
    %90 = math.exp %89 : vector<8x128xf32>
    %cst_34 = arith.constant 1.000000e+00 : f32
    %91 = vector.broadcast %cst_34 : f32 to vector<8x128xf32>
    %92 = arith.addf %91, %90 : vector<8x128xf32>
    %93 = arith.divf %91, %92 : vector<8x128xf32>
    %94 = math.tanh %88 : vector<8x128xf32>
    %95 = vector.extract_strided_slice %93 {offsets = [0, 32], sizes = [8, 32], strides = [1, 1]} : vector<8x128xf32> to vector<8x32xf32>
    %96 = arith.mulf %95, %81 : vector<8x32xf32>
    %97 = vector.extract_strided_slice %93 {offsets = [0, 0], sizes = [8, 32], strides = [1, 1]} : vector<8x128xf32> to vector<8x32xf32>
    %98 = vector.extract_strided_slice %94 {offsets = [0, 64], sizes = [8, 32], strides = [1, 1]} : vector<8x128xf32> to vector<8x32xf32>
    %99 = arith.mulf %97, %98 : vector<8x32xf32>
    %100 = arith.addf %96, %99 : vector<8x32xf32>
    %101 = vector.extract_strided_slice %93 {offsets = [0, 96], sizes = [8, 32], strides = [1, 1]} : vector<8x128xf32> to vector<8x32xf32>
    %102 = math.tanh %100 : vector<8x32xf32>
    %103 = arith.mulf %101, %102 : vector<8x32xf32>
    %c32_35 = arith.constant 32 : index
    %c0_36 = arith.constant 0 : index
    %104 = vector.load %arg10[%c32_35, %c0_36] : memref<64x32xf32, #tpu.memory_space<vmem>>, vector<8x32xf32>
    tpu.vector_store %arg10[%c32_35, %c0_36], %103 {strides = array<i32>} : memref<64x32xf32, #tpu.memory_space<vmem>>, vector<8x32xf32>,
    %c40 = arith.constant 40 : index
    %c0_37 = arith.constant 0 : index
    %105 = vector.load %arg9[%c40, %c0_37] : memref<64x128xf32, #tpu.memory_space<vmem>>, vector<8x128xf32>
    %cst_38 = arith.constant dense<0.000000e+00> : vector<8x128xf32>
    %106 = tpu.matmul %103, %7, %cst_38 {dimension_numbers = #tpu.dot_dimension_numbers<[1], [0], [0], [1], [0, 0, 1, 1], [], []>} : vector<8x32xf32>, vector<32x128xf32>, vector<8x128xf32> -> vector<8x128xf32>
    %107 = arith.addf %105, %106 : vector<8x128xf32>
    %108 = arith.negf %107 : vector<8x128xf32>
    %109 = math.exp %108 : vector<8x128xf32>
    %cst_39 = arith.constant 1.000000e+00 : f32
    %110 = vector.broadcast %cst_39 : f32 to vector<8x128xf32>
    %111 = arith.addf %110, %109 : vector<8x128xf32>
    %112 = arith.divf %110, %111 : vector<8x128xf32>
    %113 = math.tanh %107 : vector<8x128xf32>
    %114 = vector.extract_strided_slice %112 {offsets = [0, 32], sizes = [8, 32], strides = [1, 1]} : vector<8x128xf32> to vector<8x32xf32>
    %115 = arith.mulf %114, %100 : vector<8x32xf32>
    %116 = vector.extract_strided_slice %112 {offsets = [0, 0], sizes = [8, 32], strides = [1, 1]} : vector<8x128xf32> to vector<8x32xf32>
    %117 = vector.extract_strided_slice %113 {offsets = [0, 64], sizes = [8, 32], strides = [1, 1]} : vector<8x128xf32> to vector<8x32xf32>
    %118 = arith.mulf %116, %117 : vector<8x32xf32>
    %119 = arith.addf %115, %118 : vector<8x32xf32>
    %120 = vector.extract_strided_slice %112 {offsets = [0, 96], sizes = [8, 32], strides = [1, 1]} : vector<8x128xf32> to vector<8x32xf32>
    %121 = math.tanh %119 : vector<8x32xf32>
    %122 = arith.mulf %120, %121 : vector<8x32xf32>
    %c40_40 = arith.constant 40 : index
    %c0_41 = arith.constant 0 : index
    %123 = vector.load %arg10[%c40_40, %c0_41] : memref<64x32xf32, #tpu.memory_space<vmem>>, vector<8x32xf32>
    tpu.vector_store %arg10[%c40_40, %c0_41], %122 {strides = array<i32>} : memref<64x32xf32, #tpu.memory_space<vmem>>, vector<8x32xf32>,
    %c48 = arith.constant 48 : index
    %c0_42 = arith.constant 0 : index
    %124 = vector.load %arg9[%c48, %c0_42] : memref<64x128xf32, #tpu.memory_space<vmem>>, vector<8x128xf32>
    %cst_43 = arith.constant dense<0.000000e+00> : vector<8x128xf32>
    %125 = tpu.matmul %122, %7, %cst_43 {dimension_numbers = #tpu.dot_dimension_numbers<[1], [0], [0], [1], [0, 0, 1, 1], [], []>} : vector<8x32xf32>, vector<32x128xf32>, vector<8x128xf32> -> vector<8x128xf32>
    %126 = arith.addf %124, %125 : vector<8x128xf32>
    %127 = arith.negf %126 : vector<8x128xf32>
    %128 = math.exp %127 : vector<8x128xf32>
    %cst_44 = arith.constant 1.000000e+00 : f32
    %129 = vector.broadcast %cst_44 : f32 to vector<8x128xf32>
    %130 = arith.addf %129, %128 : vector<8x128xf32>
    %131 = arith.divf %129, %130 : vector<8x128xf32>
    %132 = math.tanh %126 : vector<8x128xf32>
    %133 = vector.extract_strided_slice %131 {offsets = [0, 32], sizes = [8, 32], strides = [1, 1]} : vector<8x128xf32> to vector<8x32xf32>
    %134 = arith.mulf %133, %119 : vector<8x32xf32>
    %135 = vector.extract_strided_slice %131 {offsets = [0, 0], sizes = [8, 32], strides = [1, 1]} : vector<8x128xf32> to vector<8x32xf32>
    %136 = vector.extract_strided_slice %132 {offsets = [0, 64], sizes = [8, 32], strides = [1, 1]} : vector<8x128xf32> to vector<8x32xf32>
    %137 = arith.mulf %135, %136 : vector<8x32xf32>
    %138 = arith.addf %134, %137 : vector<8x32xf32>
    %139 = vector.extract_strided_slice %131 {offsets = [0, 96], sizes = [8, 32], strides = [1, 1]} : vector<8x128xf32> to vector<8x32xf32>
    %140 = math.tanh %138 : vector<8x32xf32>
    %141 = arith.mulf %139, %140 : vector<8x32xf32>
    %c48_45 = arith.constant 48 : index
    %c0_46 = arith.constant 0 : index
    %142 = vector.load %arg10[%c48_45, %c0_46] : memref<64x32xf32, #tpu.memory_space<vmem>>, vector<8x32xf32>
    tpu.vector_store %arg10[%c48_45, %c0_46], %141 {strides = array<i32>} : memref<64x32xf32, #tpu.memory_space<vmem>>, vector<8x32xf32>,
    %c56 = arith.constant 56 : index
    %c0_47 = arith.constant 0 : index
    %143 = vector.load %arg9[%c56, %c0_47] : memref<64x128xf32, #tpu.memory_space<vmem>>, vector<8x128xf32>
    %cst_48 = arith.constant dense<0.000000e+00> : vector<8x128xf32>
    %144 = tpu.matmul %141, %7, %cst_48 {dimension_numbers = #tpu.dot_dimension_numbers<[1], [0], [0], [1], [0, 0, 1, 1], [], []>} : vector<8x32xf32>, vector<32x128xf32>, vector<8x128xf32> -> vector<8x128xf32>
    %145 = arith.addf %143, %144 : vector<8x128xf32>
    %146 = arith.negf %145 : vector<8x128xf32>
    %147 = math.exp %146 : vector<8x128xf32>
    %cst_49 = arith.constant 1.000000e+00 : f32
    %148 = vector.broadcast %cst_49 : f32 to vector<8x128xf32>
    %149 = arith.addf %148, %147 : vector<8x128xf32>
    %150 = arith.divf %148, %149 : vector<8x128xf32>
    %151 = math.tanh %145 : vector<8x128xf32>
    %152 = vector.extract_strided_slice %150 {offsets = [0, 32], sizes = [8, 32], strides = [1, 1]} : vector<8x128xf32> to vector<8x32xf32>
    %153 = arith.mulf %152, %138 : vector<8x32xf32>
    %154 = vector.extract_strided_slice %150 {offsets = [0, 0], sizes = [8, 32], strides = [1, 1]} : vector<8x128xf32> to vector<8x32xf32>
    %155 = vector.extract_strided_slice %151 {offsets = [0, 64], sizes = [8, 32], strides = [1, 1]} : vector<8x128xf32> to vector<8x32xf32>
    %156 = arith.mulf %154, %155 : vector<8x32xf32>
    %157 = arith.addf %153, %156 : vector<8x32xf32>
    %158 = vector.extract_strided_slice %150 {offsets = [0, 96], sizes = [8, 32], strides = [1, 1]} : vector<8x128xf32> to vector<8x32xf32>
    %159 = math.tanh %157 : vector<8x32xf32>
    %160 = arith.mulf %158, %159 : vector<8x32xf32>
    %c56_50 = arith.constant 56 : index
    %c0_51 = arith.constant 0 : index
    %161 = vector.load %arg10[%c56_50, %c0_51] : memref<64x32xf32, #tpu.memory_space<vmem>>, vector<8x32xf32>
    tpu.vector_store %arg10[%c56_50, %c0_51], %160 {strides = array<i32>} : memref<64x32xf32, #tpu.memory_space<vmem>>, vector<8x32xf32>,
    %c0_52 = arith.constant 0 : index
    %c0_53 = arith.constant 0 : index
    %162 = vector.load %arg10[%c0_52, %c0_53] : memref<64x32xf32, #tpu.memory_space<vmem>>, vector<64x32xf32>
    %c0_54 = arith.constant 0 : index
    %c0_55 = arith.constant 0 : index
    %163 = vector.load %arg4[%c0_54, %c0_55] : memref<32x128xf32, #tpu.memory_space<vmem>>, vector<32x128xf32>
    %cst_56 = arith.constant dense<0.000000e+00> : vector<64x128xf32>
    %164 = tpu.matmul %162, %163, %cst_56 {dimension_numbers = #tpu.dot_dimension_numbers<[1], [0], [0], [1], [0, 0, 1, 1], [], []>} : vector<64x32xf32>, vector<32x128xf32>, vector<64x128xf32> -> vector<64x128xf32>
    %c0_57 = arith.constant 0 : index
    %c0_58 = arith.constant 0 : index
    %165 = vector.load %arg5[%c0_57, %c0_58] : memref<1x128xf32, #tpu.memory_space<vmem>>, vector<1x128xf32>
    %166 = vector.broadcast %165 : vector<1x128xf32> to vector<64x128xf32>
    %167 = arith.addf %164, %166 : vector<64x128xf32>
    %c0_59 = arith.constant 0 : index
    %c0_60 = arith.constant 0 : index
    %168 = vector.load %arg6[%c0_59, %c0_60] : memref<64x128xf32, #tpu.memory_space<vmem>>, vector<64x128xf32>
    tpu.vector_store %arg6[%c0_59, %c0_60], %167 {strides = array<i32>} : memref<64x128xf32, #tpu.memory_space<vmem>>, vector<64x128xf32>,
    %c0_61 = arith.constant 0 : index
    %c0_62 = arith.constant 0 : index
    %169 = vector.load %arg7[%c0_61, %c0_62] : memref<8x32xf32, #tpu.memory_space<vmem>>, vector<8x32xf32>
    tpu.vector_store %arg7[%c0_61, %c0_62], %160 {strides = array<i32>} : memref<8x32xf32, #tpu.memory_space<vmem>>, vector<8x32xf32>,
    %c0_63 = arith.constant 0 : index
    %c0_64 = arith.constant 0 : index
    %170 = vector.load %arg8[%c0_63, %c0_64] : memref<8x32xf32, #tpu.memory_space<vmem>>, vector<8x32xf32>
    tpu.vector_store %arg8[%c0_63, %c0_64], %157 {strides = array<i32>} : memref<8x32xf32, #tpu.memory_space<vmem>>, vector<8x32xf32>,
    return
  }
}

</mosaic_0001>

<llo_original>
// kernel: critic_forward.1
$region0: #{critic_forward.1}
  #allocation0 [shape = 'u32[]', space=smem, size = 0x4, offset = 0x4, fixed_abs, tag = 'smem constant byte address 0x4 - core index']
  #allocation1 [shape = 'u32[144,128]{1,0:T(1,128)}', space=vmem, size = 0x12000, scoped, tag = 'internal scratch']
  #allocation2 [shape = 'f32[64,128]{1,0:T(8,128)}', space=vmem, size = 0x8000, scoped, tag = 'scratch operand']
  #allocation3 [shape = 'f32[64,32]{1,0:T(8,128)}', space=vmem, size = 0x8000, scoped, tag = 'scratch operand']
  %s0 = inlined_call_operand.vmem [shape: f32[64,4], index: 0, kind: input, shape index: {}]
  %s1 = inlined_call_operand.vmem [shape: f32[4,128], index: 1, kind: input, shape index: {}]
  %s2 = inlined_call_operand.vmem [shape: f32[1,128], index: 2, kind: input, shape index: {}]
  %s3 = inlined_call_operand.vmem [shape: f32[32,128], index: 3, kind: input, shape index: {}]
  %s4 = inlined_call_operand.vmem [shape: f32[32,128], index: 4, kind: input, shape index: {}]
  %s5 = inlined_call_operand.vmem [shape: f32[1,128], index: 5, kind: input, shape index: {}]
  %s6 = inlined_call_operand.vmem [shape: f32[64,128], index: 6, kind: output, shape index: {0}]
  %s7 = inlined_call_operand.vmem [shape: f32[8,32], index: 7, kind: output, shape index: {1}]
  %s8 = inlined_call_operand.vmem [shape: f32[8,32], index: 8, kind: output, shape index: {2}]
  %9 = xla_tuple %s6, %s7, %s8
  %s10 = sld [smem:[#allocation0]]
  $region50: #{critic_forward.1} parent=0
    _
  %s12 = ssub.s32 1, %s10
  %s13 = scalar_select 0, %s12, %s10
  // Predicated region
  $region2: #{critic_forward.1} parent=0 // pred_check
    _
  $region3: #{critic_forward.1} parent=0 // pred_check_branch
    %15 = sbr.rel (0) target = $region5
  $region4: #{critic_forward.1} parent=0 // pred_region
    _
  $region5: #{critic_forward.1} parent=0 // pred_fallthru
    _
  // Predicated region
  $region6: #{critic_forward.1} parent=0 // pred_check
    _
  $region7: #{critic_forward.1} parent=0 // pred_check_branch
    %17 = sbr.rel (0) target = $region9
  $region8: #{critic_forward.1} parent=0 // pred_region
    _
  $region9: #{critic_forward.1} parent=0 // pred_fallthru
    _
  // Predicated region
  $region10: #{critic_forward.1} parent=0 // pred_check
    _
  $region11: #{critic_forward.1} parent=0 // pred_check_branch
    %19 = sbr.rel (0) target = $region13
  $region12: #{critic_forward.1} parent=0 // pred_region
    _
  $region13: #{critic_forward.1} parent=0 // pred_fallthru
    _
  // Predicated region
  $region14: #{critic_forward.1} parent=0 // pred_check
    _
  $region15: #{critic_forward.1} parent=0 // pred_check_branch
    %21 = sbr.rel (0) target = $region17
  $region16: #{critic_forward.1} parent=0 // pred_region
    _
  $region17: #{critic_forward.1} parent=0 // pred_fallthru
    _
  // Predicated region
  $region18: #{critic_forward.1} parent=0 // pred_check
    _
  $region19: #{critic_forward.1} parent=0 // pred_check_branch
    %23 = sbr.rel (0) target = $region21
  $region20: #{critic_forward.1} parent=0 // pred_region
    _
  $region21: #{critic_forward.1} parent=0 // pred_fallthru
    _
  // Predicated region
  $region22: #{critic_forward.1} parent=0 // pred_check
    _
  $region23: #{critic_forward.1} parent=0 // pred_check_branch
    %25 = sbr.rel (0) target = $region25
  $region24: #{critic_forward.1} parent=0 // pred_region
    _
  $region25: #{critic_forward.1} parent=0 // pred_fallthru
    _
  %v26 = vld [vmem:[%s0] sm:$0xff]
  %v27 = vld [vmem:[%s0 + $0x8] sm:$0xff]
  %v28 = vld [vmem:[%s0 + $0x10] sm:$0xff]
  %v29 = vld [vmem:[%s0 + $0x18] sm:$0xff]
  %v30 = vld [vmem:[%s0 + $0x20] sm:$0xff]
  %v31 = vld [vmem:[%s0 + $0x28] sm:$0xff]
  %v32 = vld [vmem:[%s0 + $0x30] sm:$0xff]
  %v33 = vld [vmem:[%s0 + $0x38] sm:$0xff]
  %v34 = vld [vmem:[%s1] sm:$0xf]
  %v35 = vld [vmem:[%s2] sm:$0x1]
  %v37 = vlaneseq
  %v38 = vshrl.u32 %v37, 7
  %v39 = vsub.s32 0, %v38
  %v40 = vrot.slane %v35, %v39
  %vm42 = vcmask 31744
  %v44 = vsel %vm42, %v26, 0
  %v47 = vsel %vm42, %v27, 0
  %v50 = vsel %vm42, %v28, 0
  %v53 = vsel %vm42, %v29, 0
  %v56 = vsel %vm42, %v30, 0
  %v59 = vsel %vm42, %v31, 0
  %v62 = vsel %vm42, %v32, 0
  %v65 = vsel %vm42, %v33, 0
  %vm67 = vcmask 1043456
  %v69 = vsel %vm67, %v34, 0
  %71 = vmatprep.subr.mxu0 0.0
  %72 = vmatpush1.msra.mxu0 %v69
  %73 = vmatprep.subr.mxu0 0.0
  %74 = vmatpush1.msra.mxu0 0.0
  %75 = vmatprep.subr.mxu0 0.0
  %76 = vmatpush1.msra.mxu0 0.0
  %77 = vmatprep.subr.mxu0 0.0
  %78 = vmatpush1.msra.mxu0 0.0
  %79 = vmatprep.subr.mxu0 0.0
  %80 = vmatpush1.msra.mxu0 0.0
  %81 = vmatprep.subr.mxu0 0.0
  %82 = vmatpush1.msra.mxu0 0.0
  %83 = vmatprep.subr.mxu0 0.0
  %84 = vmatpush1.msra.mxu0 0.0
  %85 = vmatprep.subr.mxu0 0.0
  %86 = vmatpush1.msra.mxu0 0.0
  %87 = vmatprep.subr.mxu0 0.0
  %88 = vmatpush1.msra.mxu0 0.0
  %89 = vmatprep.subr.mxu0 0.0
  %90 = vmatpush1.msra.mxu0 0.0
  %91 = vmatprep.subr.mxu0 0.0
  %92 = vmatpush1.msra.mxu0 0.0
  %93 = vmatprep.subr.mxu0 0.0
  %94 = vmatpush1.msra.mxu0 0.0
  %95 = vmatprep.subr.mxu0 0.0
  %96 = vmatpush1.msra.mxu0 0.0
  %97 = vmatprep.subr.mxu0 0.0
  %98 = vmatpush1.msra.mxu0 0.0
  %99 = vmatprep.subr.mxu0 0.0
  %100 = vmatpush1.msra.mxu0 0.0
  %101 = vmatprep.subr.mxu0 0.0
  %102 = vmatpush1.msra.mxu0 0.0
  %103 = vmatprep.subr.mxu0 0.0
  %104 = vmatpush1.msra.mxu0 0.0
  %105 = vmatprep.subr.mxu0 0.0
  %106 = vmatpush1.msra.mxu0 0.0
  %107 = vmatprep.subr.mxu0 0.0
  %108 = vmatpush1.msra.mxu0 0.0
  %109 = vmatprep.subr.mxu0 0.0
  %110 = vmatpush1.msra.mxu0 0.0
  %111 = vmatprep.subr.mxu0 0.0
  %112 = vmatpush1.msra.mxu0 0.0
  %113 = vmatprep.subr.mxu0 0.0
  %114 = vmatpush1.msra.mxu0 0.0
  %115 = vmatprep.subr.mxu0 0.0
  %116 = vmatpush1.msra.mxu0 0.0
  %117 = vmatprep.subr.mxu0 0.0
  %118 = vmatpush1.msra.mxu0 0.0
  %119 = vmatprep.subr.mxu0 0.0
  %120 = vmatpush1.msra.mxu0 0.0
  %121 = vmatprep.subr.mxu0 0.0
  %122 = vmatpush1.msra.mxu0 0.0
  %123 = vmatprep.subr.mxu0 0.0
  %124 = vmatpush1.msra.mxu0 0.0
  %125 = vmatprep.subr.mxu0 0.0
  %126 = vmatpush1.msra.mxu0 0.0
  %127 = vmatprep.subr.mxu0 0.0
  %128 = vmatpush1.msra.mxu0 0.0
  %129 = vmatprep.subr.mxu0 0.0
  %130 = vmatpush1.msra.mxu0 0.0
  %131 = vmatprep.subr.mxu0 0.0
  %132 = vmatpush1.msra.mxu0 0.0
  %133 = vmatprep.subr.mxu0 0.0
  %134 = vmatpush1.msra.mxu0 0.0
  %135 = vmatprep.mubr.f32.mxu0 0.0
  %136 = vmatmul.mubr.f32.gmra.mrb[0].mxu0 %v44
  %v137 = vpop.f32.mrb[0].mxu0
  %v138 = vadd.f32 %v40, %v137
  %v139 = vpop.f32.mrb[0].mxu0
  %140 = vmatprep.mubr.f32.mxu0 0.0
  %141 = vmatmul.mubr.f32.gmra.mrb[0].mxu0 %v47
  %v142 = vpop.f32.mrb[0].mxu0
  %v143 = vadd.f32 %v40, %v142
  %v144 = vpop.f32.mrb[0].mxu0
  %145 = vmatprep.mubr.f32.mxu0 0.0
  %146 = vmatmul.mubr.f32.gmra.mrb[0].mxu0 %v50
  %v147 = vpop.f32.mrb[0].mxu0
  %v148 = vadd.f32 %v40, %v147
  %v149 = vpop.f32.mrb[0].mxu0
  %150 = vmatprep.mubr.f32.mxu0 0.0
  %151 = vmatmul.mubr.f32.gmra.mrb[0].mxu0 %v53
  %v152 = vpop.f32.mrb[0].mxu0
  %v153 = vadd.f32 %v40, %v152
  %v154 = vpop.f32.mrb[0].mxu0
  %155 = vmatprep.mubr.f32.mxu0 0.0
  %156 = vmatmul.mubr.f32.gmra.mrb[0].mxu0 %v56
  %v157 = vpop.f32.mrb[0].mxu0
  %v158 = vadd.f32 %v40, %v157
  %v159 = vpop.f32.mrb[0].mxu0
  %160 = vmatprep.mubr.f32.mxu0 0.0
  %161 = vmatmul.mubr.f32.gmra.mrb[0].mxu0 %v59
  %v162 = vpop.f32.mrb[0].mxu0
  %v163 = vadd.f32 %v40, %v162
  %v164 = vpop.f32.mrb[0].mxu0
  %165 = vmatprep.mubr.f32.mxu0 0.0
  %166 = vmatmul.mubr.f32.gmra.mrb[0].mxu0 %v62
  %v167 = vpop.f32.mrb[0].mxu0
  %v168 = vadd.f32 %v40, %v167
  %v169 = vpop.f32.mrb[0].mxu0
  %170 = vmatprep.mubr.f32.mxu0 0.0
  %171 = vmatmul.mubr.f32.gmra.mrb[0].mxu0 %v65
  %v172 = vpop.f32.mrb[0].mxu0
  %v173 = vadd.f32 %v40, %v172
  %v174 = vpop.f32.mrb[0].mxu0
  %175 = vdwg.mxu0
  %176 = vst [vmem:[#allocation2] sm:$0xff] %v138
  %177 = vst [vmem:[#allocation2 + $0x8] sm:$0xff] %v143
  %178 = vst [vmem:[#allocation2 + $0x10] sm:$0xff] %v148
  %179 = vst [vmem:[#allocation2 + $0x18] sm:$0xff] %v153
  %180 = vst [vmem:[#allocation2 + $0x20] sm:$0xff] %v158
  %181 = vst [vmem:[#allocation2 + $0x28] sm:$0xff] %v163
  %182 = vst [vmem:[#allocation2 + $0x30] sm:$0xff] %v168
  %183 = vst [vmem:[#allocation2 + $0x38] sm:$0xff] %v173
  %v184 = vld [vmem:[%s3] sm:$0xff]
  %v185 = vld [vmem:[%s3 + $0x8] sm:$0xff]
  %v186 = vld [vmem:[%s3 + $0x10] sm:$0xff]
  %v187 = vld [vmem:[%s3 + $0x18] sm:$0xff]
  %v188 = vld [vmem:[#allocation2] sm:$0xff]
  %vm189 = vcmask 261120
  %v191 = vsel %vm189, 0.0, 0
  %193 = vmatprep.subr.mxu0 0.0
  %194 = vmatpush1.msra.mxu0 %v184
  %195 = vmatprep.subr.mxu0 0.0
  %196 = vmatpush1.msra.mxu0 %v185
  %197 = vmatprep.subr.mxu0 0.0
  %198 = vmatpush1.msra.mxu0 %v186
  %199 = vmatprep.subr.mxu0 0.0
  %200 = vmatpush1.msra.mxu0 %v187
  %201 = vmatprep.subr.mxu0 0.0
  %202 = vmatpush1.msra.mxu0 0.0
  %203 = vmatprep.subr.mxu0 0.0
  %204 = vmatpush1.msra.mxu0 0.0
  %205 = vmatprep.subr.mxu0 0.0
  %206 = vmatpush1.msra.mxu0 0.0
  %207 = vmatprep.subr.mxu0 0.0
  %208 = vmatpush1.msra.mxu0 0.0
  %209 = vmatprep.subr.mxu0 0.0
  %210 = vmatpush1.msra.mxu0 0.0
  %211 = vmatprep.subr.mxu0 0.0
  %212 = vmatpush1.msra.mxu0 0.0
  %213 = vmatprep.subr.mxu0 0.0
  %214 = vmatpush1.msra.mxu0 0.0
  %215 = vmatprep.subr.mxu0 0.0
  %216 = vmatpush1.msra.mxu0 0.0
  %217 = vmatprep.subr.mxu0 0.0
  %218 = vmatpush1.msra.mxu0 0.0
  %219 = vmatprep.subr.mxu0 0.0
  %220 = vmatpush1.msra.mxu0 0.0
  %221 = vmatprep.subr.mxu0 0.0
  %222 = vmatpush1.msra.mxu0 0.0
  %223 = vmatprep.subr.mxu0 0.0
  %224 = vmatpush1.msra.mxu0 0.0
  %225 = vmatprep.subr.mxu0 0.0
  %226 = vmatpush1.msra.mxu0 0.0
  %227 = vmatprep.subr.mxu0 0.0
  %228 = vmatpush1.msra.mxu0 0.0
  %229 = vmatprep.subr.mxu0 0.0
  %230 = vmatpush1.msra.mxu0 0.0
  %231 = vmatprep.subr.mxu0 0.0
  %232 = vmatpush1.msra.mxu0 0.0
  %233 = vmatprep.subr.mxu0 0.0
  %234 = vmatpush1.msra.mxu0 0.0
  %235 = vmatprep.subr.mxu0 0.0
  %236 = vmatpush1.msra.mxu0 0.0
  %237 = vmatprep.subr.mxu0 0.0
  %238 = vmatpush1.msra.mxu0 0.0
  %239 = vmatprep.subr.mxu0 0.0
  %240 = vmatpush1.msra.mxu0 0.0
  %241 = vmatprep.subr.mxu0 0.0
  %242 = vmatpush1.msra.mxu0 0.0
  %243 = vmatprep.subr.mxu0 0.0
  %244 = vmatpush1.msra.mxu0 0.0
  %245 = vmatprep.subr.mxu0 0.0
  %246 = vmatpush1.msra.mxu0 0.0
  %247 = vmatprep.subr.mxu0 0.0
  %248 = vmatpush1.msra.mxu0 0.0
  %249 = vmatprep.subr.mxu0 0.0
  %250 = vmatpush1.msra.mxu0 0.0
  %251 = vmatprep.subr.mxu0 0.0
  %252 = vmatpush1.msra.mxu0 0.0
  %253 = vmatprep.subr.mxu0 0.0
  %254 = vmatpush1.msra.mxu0 0.0
  %255 = vmatprep.subr.mxu0 0.0
  %256 = vmatpush1.msra.mxu0 0.0
  %257 = vmatprep.mubr.f32.mxu0 0.0
  %258 = vmatmul.mubr.f32.gmra.mrb[0].mxu0 %v191
  %v259 = vpop.f32.mrb[0].mxu0
  %v260 = vadd.f32 0.0, %v259
  %v261 = vpop.f32.mrb[0].mxu0
  %262 = vdwg.mxu0
  %v263 = vadd.f32 %v188, %v260
  %v264 = vxor.u32 %v263, 2147483648
  %v265 = vmul.f32 %v264, 1.442695
  %v266 = vpow.pop %v265
  %v267 = vadd.f32 %v266, 1.0
  %v268 = vrcp.pop %v267
  %v269 = vmul.f32 1.0, %v268
  %v270 = vtanh.pop %v263
  %v271 = vmul.f32 %v269, 0.0
  %273 = vrot.lane.b32.xlu0 %v270, 64
  %v274 = vpop.permute.xlu0 %273
  %v276 = vmul.f32 %v269, %v274
  %278 = vrot.lane.b32.xlu0 %v276, 32
  %v279 = vpop.permute.xlu0 %278
  %v281 = vadd.f32 %v271, %v279
  %v282 = vtanh.pop %v281
  %284 = vrot.lane.b32.xlu0 %v282, 64
  %v285 = vpop.permute.xlu0 %284
  %v287 = vmul.f32 %v269, %v285
  %289 = vrot.lane.b32.xlu0 %v287, 32
  %v290 = vpop.permute.xlu0 %289
  %292 = vst.msk [vmem:[#allocation3] sm:$0xff] %vm189, %v290
  %v293 = vld [vmem:[#allocation2 + $0x8] sm:$0xff]
  %v294 = vsel %vm189, %v290, 0
  %296 = vmatprep.subr.mxu0 0.0
  %297 = vmatpush1.msra.mxu0 %v184
  %298 = vmatprep.subr.mxu0 0.0
  %299 = vmatpush1.msra.mxu0 %v185
  %300 = vmatprep.subr.mxu0 0.0
  %301 = vmatpush1.msra.mxu0 %v186
  %302 = vmatprep.subr.mxu0 0.0
  %303 = vmatpush1.msra.mxu0 %v187
  %304 = vmatprep.subr.mxu0 0.0
  %305 = vmatpush1.msra.mxu0 0.0
  %306 = vmatprep.subr.mxu0 0.0
  %307 = vmatpush1.msra.mxu0 0.0
  %308 = vmatprep.subr.mxu0 0.0
  %309 = vmatpush1.msra.mxu0 0.0
  %310 = vmatprep.subr.mxu0 0.0
  %311 = vmatpush1.msra.mxu0 0.0
  %312 = vmatprep.subr.mxu0 0.0
  %313 = vmatpush1.msra.mxu0 0.0
  %314 = vmatprep.subr.mxu0 0.0
  %315 = vmatpush1.msra.mxu0 0.0
  %316 = vmatprep.subr.mxu0 0.0
  %317 = vmatpush1.msra.mxu0 0.0
  %318 = vmatprep.subr.mxu0 0.0
  %319 = vmatpush1.msra.mxu0 0.0
  %320 = vmatprep.subr.mxu0 0.0
  %321 = vmatpush1.msra.mxu0 0.0
  %322 = vmatprep.subr.mxu0 0.0
  %323 = vmatpush1.msra.mxu0 0.0
  %324 = vmatprep.subr.mxu0 0.0
  %325 = vmatpush1.msra.mxu0 0.0
  %326 = vmatprep.subr.mxu0 0.0
  %327 = vmatpush1.msra.mxu0 0.0
  %328 = vmatprep.subr.mxu0 0.0
  %329 = vmatpush1.msra.mxu0 0.0
  %330 = vmatprep.subr.mxu0 0.0
  %331 = vmatpush1.msra.mxu0 0.0
  %332 = vmatprep.subr.mxu0 0.0
  %333 = vmatpush1.msra.mxu0 0.0
  %334 = vmatprep.subr.mxu0 0.0
  %335 = vmatpush1.msra.mxu0 0.0
  %336 = vmatprep.subr.mxu0 0.0
  %337 = vmatpush1.msra.mxu0 0.0
  %338 = vmatprep.subr.mxu0 0.0
  %339 = vmatpush1.msra.mxu0 0.0
  %340 = vmatprep.subr.mxu0 0.0
  %341 = vmatpush1.msra.mxu0 0.0
  %342 = vmatprep.subr.mxu0 0.0
  %343 = vmatpush1.msra.mxu0 0.0
  %344 = vmatprep.subr.mxu0 0.0
  %345 = vmatpush1.msra.mxu0 0.0
  %346 = vmatprep.subr.mxu0 0.0
  %347 = vmatpush1.msra.mxu0 0.0
  %348 = vmatprep.subr.mxu0 0.0
  %349 = vmatpush1.msra.mxu0 0.0
  %350 = vmatprep.subr.mxu0 0.0
  %351 = vmatpush1.msra.mxu0 0.0
  %352 = vmatprep.subr.mxu0 0.0
  %353 = vmatpush1.msra.mxu0 0.0
  %354 = vmatprep.subr.mxu0 0.0
  %355 = vmatpush1.msra.mxu0 0.0
  %356 = vmatprep.subr.mxu0 0.0
  %357 = vmatpush1.msra.mxu0 0.0
  %358 = vmatprep.subr.mxu0 0.0
  %359 = vmatpush1.msra.mxu0 0.0
  %360 = vmatprep.mubr.f32.mxu0 0.0
  %361 = vmatmul.mubr.f32.gmra.mrb[0].mxu0 %v294
  %v362 = vpop.f32.mrb[0].mxu0
  %v363 = vadd.f32 0.0, %v362
  %v364 = vpop.f32.mrb[0].mxu0
  %365 = vdwg.mxu0
  %v366 = vadd.f32 %v293, %v363
  %v367 = vxor.u32 %v366, 2147483648
  %v368 = vmul.f32 %v367, 1.442695
  %v369 = vpow.pop %v368
  %v370 = vadd.f32 %v369, 1.0
  %v371 = vrcp.pop %v370
  %v372 = vmul.f32 1.0, %v371
  %v373 = vtanh.pop %v366
  %v374 = vmul.f32 %v372, %v281
  %376 = vrot.lane.b32.xlu0 %v373, 64
  %v377 = vpop.permute.xlu0 %376
  %v379 = vmul.f32 %v372, %v377
  %381 = vrot.lane.b32.xlu0 %v379, 32
  %v382 = vpop.permute.xlu0 %381
  %v384 = vadd.f32 %v374, %v382
  %v385 = vtanh.pop %v384
  %387 = vrot.lane.b32.xlu0 %v385, 64
  %v388 = vpop.permute.xlu0 %387
  %v390 = vmul.f32 %v372, %v388
  %392 = vrot.lane.b32.xlu0 %v390, 32
  %v393 = vpop.permute.xlu0 %392
  %395 = vst.msk [vmem:[#allocation3 + $0x8] sm:$0xff] %vm189, %v393
  %v396 = vld [vmem:[#allocation2 + $0x10] sm:$0xff]
  %v397 = vsel %vm189, %v393, 0
  %399 = vmatprep.subr.mxu0 0.0
  %400 = vmatpush1.msra.mxu0 %v184
  %401 = vmatprep.subr.mxu0 0.0
  %402 = vmatpush1.msra.mxu0 %v185
  %403 = vmatprep.subr.mxu0 0.0
  %404 = vmatpush1.msra.mxu0 %v186
  %405 = vmatprep.subr.mxu0 0.0
  %406 = vmatpush1.msra.mxu0 %v187
  %407 = vmatprep.subr.mxu0 0.0
  %408 = vmatpush1.msra.mxu0 0.0
  %409 = vmatprep.subr.mxu0 0.0
  %410 = vmatpush1.msra.mxu0 0.0
  %411 = vmatprep.subr.mxu0 0.0
  %412 = vmatpush1.msra.mxu0 0.0
  %413 = vmatprep.subr.mxu0 0.0
  %414 = vmatpush1.msra.mxu0 0.0
  %415 = vmatprep.subr.mxu0 0.0
  %416 = vmatpush1.msra.mxu0 0.0
  %417 = vmatprep.subr.mxu0 0.0
  %418 = vmatpush1.msra.mxu0 0.0
  %419 = vmatprep.subr.mxu0 0.0
  %420 = vmatpush1.msra.mxu0 0.0
  %421 = vmatprep.subr.mxu0 0.0
  %422 = vmatpush1.msra.mxu0 0.0
  %423 = vmatprep.subr.mxu0 0.0
  %424 = vmatpush1.msra.mxu0 0.0
  %425 = vmatprep.subr.mxu0 0.0
  %426 = vmatpush1.msra.mxu0 0.0
  %427 = vmatprep.subr.mxu0 0.0
  %428 = vmatpush1.msra.mxu0 0.0
  %429 = vmatprep.subr.mxu0 0.0
  %430 = vmatpush1.msra.mxu0 0.0
  %431 = vmatprep.subr.mxu0 0.0
  %432 = vmatpush1.msra.mxu0 0.0
  %433 = vmatprep.subr.mxu0 0.0
  %434 = vmatpush1.msra.mxu0 0.0
  %435 = vmatprep.subr.mxu0 0.0
  %436 = vmatpush1.msra.mxu0 0.0
  %437 = vmatprep.subr.mxu0 0.0
  %438 = vmatpush1.msra.mxu0 0.0
  %439 = vmatprep.subr.mxu0 0.0
  %440 = vmatpush1.msra.mxu0 0.0
  %441 = vmatprep.subr.mxu0 0.0
  %442 = vmatpush1.msra.mxu0 0.0
  %443 = vmatprep.subr.mxu0 0.0
  %444 = vmatpush1.msra.mxu0 0.0
  %445 = vmatprep.subr.mxu0 0.0
  %446 = vmatpush1.msra.mxu0 0.0
  %447 = vmatprep.subr.mxu0 0.0
  %448 = vmatpush1.msra.mxu0 0.0
  %449 = vmatprep.subr.mxu0 0.0
  %450 = vmatpush1.msra.mxu0 0.0
  %451 = vmatprep.subr.mxu0 0.0
  %452 = vmatpush1.msra.mxu0 0.0
  %453 = vmatprep.subr.mxu0 0.0
  %454 = vmatpush1.msra.mxu0 0.0
  %455 = vmatprep.subr.mxu0 0.0
  %456 = vmatpush1.msra.mxu0 0.0
  %457 = vmatprep.subr.mxu0 0.0
  %458 = vmatpush1.msra.mxu0 0.0
  %459 = vmatprep.subr.mxu0 0.0
  %460 = vmatpush1.msra.mxu0 0.0
  %461 = vmatprep.subr.mxu0 0.0
  %462 = vmatpush1.msra.mxu0 0.0
  %463 = vmatprep.mubr.f32.mxu0 0.0
  %464 = vmatmul.mubr.f32.gmra.mrb[0].mxu0 %v397
  %v465 = vpop.f32.mrb[0].mxu0
  %v466 = vadd.f32 0.0, %v465
  %v467 = vpop.f32.mrb[0].mxu0
  %468 = vdwg.mxu0
  %v469 = vadd.f32 %v396, %v466
  %v470 = vxor.u32 %v469, 2147483648
  %v471 = vmul.f32 %v470, 1.442695
  %v472 = vpow.pop %v471
  %v473 = vadd.f32 %v472, 1.0
  %v474 = vrcp.pop %v473
  %v475 = vmul.f32 1.0, %v474
  %v476 = vtanh.pop %v469
  %v477 = vmul.f32 %v475, %v384
  %479 = vrot.lane.b32.xlu0 %v476, 64
  %v480 = vpop.permute.xlu0 %479
  %v482 = vmul.f32 %v475, %v480
  %484 = vrot.lane.b32.xlu0 %v482, 32
  %v485 = vpop.permute.xlu0 %484
  %v487 = vadd.f32 %v477, %v485
  %v488 = vtanh.pop %v487
  %490 = vrot.lane.b32.xlu0 %v488, 64
  %v491 = vpop.permute.xlu0 %490
  %v493 = vmul.f32 %v475, %v491
  %495 = vrot.lane.b32.xlu0 %v493, 32
  %v496 = vpop.permute.xlu0 %495
  %498 = vst.msk [vmem:[#allocation3 + $0x10] sm:$0xff] %vm189, %v496
  %v499 = vld [vmem:[#allocation2 + $0x18] sm:$0xff]
  %v500 = vsel %vm189, %v496, 0
  %502 = vmatprep.subr.mxu0 0.0
  %503 = vmatpush1.msra.mxu0 %v184
  %504 = vmatprep.subr.mxu0 0.0
  %505 = vmatpush1.msra.mxu0 %v185
  %506 = vmatprep.subr.mxu0 0.0
  %507 = vmatpush1.msra.mxu0 %v186
  %508 = vmatprep.subr.mxu0 0.0
  %509 = vmatpush1.msra.mxu0 %v187
  %510 = vmatprep.subr.mxu0 0.0
  %511 = vmatpush1.msra.mxu0 0.0
  %512 = vmatprep.subr.mxu0 0.0
  %513 = vmatpush1.msra.mxu0 0.0
  %514 = vmatprep.subr.mxu0 0.0
  %515 = vmatpush1.msra.mxu0 0.0
  %516 = vmatprep.subr.mxu0 0.0
  %517 = vmatpush1.msra.mxu0 0.0
  %518 = vmatprep.subr.mxu0 0.0
  %519 = vmatpush1.msra.mxu0 0.0
  %520 = vmatprep.subr.mxu0 0.0
  %521 = vmatpush1.msra.mxu0 0.0
  %522 = vmatprep.subr.mxu0 0.0
  %523 = vmatpush1.msra.mxu0 0.0
  %524 = vmatprep.subr.mxu0 0.0
  %525 = vmatpush1.msra.mxu0 0.0
  %526 = vmatprep.subr.mxu0 0.0
  %527 = vmatpush1.msra.mxu0 0.0
  %528 = vmatprep.subr.mxu0 0.0
  %529 = vmatpush1.msra.mxu0 0.0
  %530 = vmatprep.subr.mxu0 0.0
  %531 = vmatpush1.msra.mxu0 0.0
  %532 = vmatprep.subr.mxu0 0.0
  %533 = vmatpush1.msra.mxu0 0.0
  %534 = vmatprep.subr.mxu0 0.0
  %535 = vmatpush1.msra.mxu0 0.0
  %536 = vmatprep.subr.mxu0 0.0
  %537 = vmatpush1.msra.mxu0 0.0
  %538 = vmatprep.subr.mxu0 0.0
  %539 = vmatpush1.msra.mxu0 0.0
  %540 = vmatprep.subr.mxu0 0.0
  %541 = vmatpush1.msra.mxu0 0.0
  %542 = vmatprep.subr.mxu0 0.0
  %543 = vmatpush1.msra.mxu0 0.0
  %544 = vmatprep.subr.mxu0 0.0
  %545 = vmatpush1.msra.mxu0 0.0
  %546 = vmatprep.subr.mxu0 0.0
  %547 = vmatpush1.msra.mxu0 0.0
  %548 = vmatprep.subr.mxu0 0.0
  %549 = vmatpush1.msra.mxu0 0.0
  %550 = vmatprep.subr.mxu0 0.0
  %551 = vmatpush1.msra.mxu0 0.0
  %552 = vmatprep.subr.mxu0 0.0
  %553 = vmatpush1.msra.mxu0 0.0
  %554 = vmatprep.subr.mxu0 0.0
  %555 = vmatpush1.msra.mxu0 0.0
  %556 = vmatprep.subr.mxu0 0.0
  %557 = vmatpush1.msra.mxu0 0.0
  %558 = vmatprep.subr.mxu0 0.0
  %559 = vmatpush1.msra.mxu0 0.0
  %560 = vmatprep.subr.mxu0 0.0
  %561 = vmatpush1.msra.mxu0 0.0
  %562 = vmatprep.subr.mxu0 0.0
  %563 = vmatpush1.msra.mxu0 0.0
  %564 = vmatprep.subr.mxu0 0.0
  %565 = vmatpush1.msra.mxu0 0.0
  %566 = vmatprep.mubr.f32.mxu0 0.0
  %567 = vmatmul.mubr.f32.gmra.mrb[0].mxu0 %v500
  %v568 = vpop.f32.mrb[0].mxu0
  %v569 = vadd.f32 0.0, %v568
  %v570 = vpop.f32.mrb[0].mxu0
  %571 = vdwg.mxu0
  %v572 = vadd.f32 %v499, %v569
  %v573 = vxor.u32 %v572, 2147483648
  %v574 = vmul.f32 %v573, 1.442695
  %v575 = vpow.pop %v574
  %v576 = vadd.f32 %v575, 1.0
  %v577 = vrcp.pop %v576
  %v578 = vmul.f32 1.0, %v577
  %v579 = vtanh.pop %v572
  %v580 = vmul.f32 %v578, %v487
  %582 = vrot.lane.b32.xlu0 %v579, 64
  %v583 = vpop.permute.xlu0 %582
  %v585 = vmul.f32 %v578, %v583
  %587 = vrot.lane.b32.xlu0 %v585, 32
  %v588 = vpop.permute.xlu0 %587
  %v590 = vadd.f32 %v580, %v588
  %v591 = vtanh.pop %v590
  %593 = vrot.lane.b32.xlu0 %v591, 64
  %v594 = vpop.permute.xlu0 %593
  %v596 = vmul.f32 %v578, %v594
  %598 = vrot.lane.b32.xlu0 %v596, 32
  %v599 = vpop.permute.xlu0 %598
  %601 = vst.msk [vmem:[#allocation3 + $0x18] sm:$0xff] %vm189, %v599
  %v602 = vld [vmem:[#allocation2 + $0x20] sm:$0xff]
  %v603 = vsel %vm189, %v599, 0
  %605 = vmatprep.subr.mxu0 0.0
  %606 = vmatpush1.msra.mxu0 %v184
  %607 = vmatprep.subr.mxu0 0.0
  %608 = vmatpush1.msra.mxu0 %v185
  %609 = vmatprep.subr.mxu0 0.0
  %610 = vmatpush1.msra.mxu0 %v186
  %611 = vmatprep.subr.mxu0 0.0
  %612 = vmatpush1.msra.mxu0 %v187
  %613 = vmatprep.subr.mxu0 0.0
  %614 = vmatpush1.msra.mxu0 0.0
  %615 = vmatprep.subr.mxu0 0.0
  %616 = vmatpush1.msra.mxu0 0.0
  %617 = vmatprep.subr.mxu0 0.0
  %618 = vmatpush1.msra.mxu0 0.0
  %619 = vmatprep.subr.mxu0 0.0
  %620 = vmatpush1.msra.mxu0 0.0
  %621 = vmatprep.subr.mxu0 0.0
  %622 = vmatpush1.msra.mxu0 0.0
  %623 = vmatprep.subr.mxu0 0.0
  %624 = vmatpush1.msra.mxu0 0.0
  %625 = vmatprep.subr.mxu0 0.0
  %626 = vmatpush1.msra.mxu0 0.0
  %627 = vmatprep.subr.mxu0 0.0
  %628 = vmatpush1.msra.mxu0 0.0
  %629 = vmatprep.subr.mxu0 0.0
  %630 = vmatpush1.msra.mxu0 0.0
  %631 = vmatprep.subr.mxu0 0.0
  %632 = vmatpush1.msra.mxu0 0.0
  %633 = vmatprep.subr.mxu0 0.0
  %634 = vmatpush1.msra.mxu0 0.0
  %635 = vmatprep.subr.mxu0 0.0
  %636 = vmatpush1.msra.mxu0 0.0
  %637 = vmatprep.subr.mxu0 0.0
  %638 = vmatpush1.msra.mxu0 0.0
  %639 = vmatprep.subr.mxu0 0.0
  %640 = vmatpush1.msra.mxu0 0.0
  %641 = vmatprep.subr.mxu0 0.0
  %642 = vmatpush1.msra.mxu0 0.0
  %643 = vmatprep.subr.mxu0 0.0
  %644 = vmatpush1.msra.mxu0 0.0
  %645 = vmatprep.subr.mxu0 0.0
  %646 = vmatpush1.msra.mxu0 0.0
  %647 = vmatprep.subr.mxu0 0.0
  %648 = vmatpush1.msra.mxu0 0.0
  %649 = vmatprep.subr.mxu0 0.0
  %650 = vmatpush1.msra.mxu0 0.0
  %651 = vmatprep.subr.mxu0 0.0
  %652 = vmatpush1.msra.mxu0 0.0
  %653 = vmatprep.subr.mxu0 0.0
  %654 = vmatpush1.msra.mxu0 0.0
  %655 = vmatprep.subr.mxu0 0.0
  %656 = vmatpush1.msra.mxu0 0.0
  %657 = vmatprep.subr.mxu0 0.0
  %658 = vmatpush1.msra.mxu0 0.0
  %659 = vmatprep.subr.mxu0 0.0
  %660 = vmatpush1.msra.mxu0 0.0
  %661 = vmatprep.subr.mxu0 0.0
  %662 = vmatpush1.msra.mxu0 0.0
  %663 = vmatprep.subr.mxu0 0.0
  %664 = vmatpush1.msra.mxu0 0.0
  %665 = vmatprep.subr.mxu0 0.0
  %666 = vmatpush1.msra.mxu0 0.0
  %667 = vmatprep.subr.mxu0 0.0
  %668 = vmatpush1.msra.mxu0 0.0
  %669 = vmatprep.mubr.f32.mxu0 0.0
  %670 = vmatmul.mubr.f32.gmra.mrb[0].mxu0 %v603
  %v671 = vpop.f32.mrb[0].mxu0
  %v672 = vadd.f32 0.0, %v671
  %v673 = vpop.f32.mrb[0].mxu0
  %674 = vdwg.mxu0
  %v675 = vadd.f32 %v602, %v672
  %v676 = vxor.u32 %v675, 2147483648
  %v677 = vmul.f32 %v676, 1.442695
  %v678 = vpow.pop %v677
  %v679 = vadd.f32 %v678, 1.0
  %v680 = vrcp.pop %v679
  %v681 = vmul.f32 1.0, %v680
  %v682 = vtanh.pop %v675
  %v683 = vmul.f32 %v681, %v590
  %685 = vrot.lane.b32.xlu0 %v682, 64
  %v686 = vpop.permute.xlu0 %685
  %v688 = vmul.f32 %v681, %v686
  %690 = vrot.lane.b32.xlu0 %v688, 32
  %v691 = vpop.permute.xlu0 %690
  %v693 = vadd.f32 %v683, %v691
  %v694 = vtanh.pop %v693
  %696 = vrot.lane.b32.xlu0 %v694, 64
  %v697 = vpop.permute.xlu0 %696
  %v699 = vmul.f32 %v681, %v697
  %701 = vrot.lane.b32.xlu0 %v699, 32
  %v702 = vpop.permute.xlu0 %701
  %704 = vst.msk [vmem:[#allocation3 + $0x20] sm:$0xff] %vm189, %v702
  %v705 = vld [vmem:[#allocation2 + $0x28] sm:$0xff]
  %v706 = vsel %vm189, %v702, 0
  %708 = vmatprep.subr.mxu0 0.0
  %709 = vmatpush1.msra.mxu0 %v184
  %710 = vmatprep.subr.mxu0 0.0
  %711 = vmatpush1.msra.mxu0 %v185
  %712 = vmatprep.subr.mxu0 0.0
  %713 = vmatpush1.msra.mxu0 %v186
  %714 = vmatprep.subr.mxu0 0.0
  %715 = vmatpush1.msra.mxu0 %v187
  %716 = vmatprep.subr.mxu0 0.0
  %717 = vmatpush1.msra.mxu0 0.0
  %718 = vmatprep.subr.mxu0 0.0
  %719 = vmatpush1.msra.mxu0 0.0
  %720 = vmatprep.subr.mxu0 0.0
  %721 = vmatpush1.msra.mxu0 0.0
  %722 = vmatprep.subr.mxu0 0.0
  %723 = vmatpush1.msra.mxu0 0.0
  %724 = vmatprep.subr.mxu0 0.0
  %725 = vmatpush1.msra.mxu0 0.0
  %726 = vmatprep.subr.mxu0 0.0
  %727 = vmatpush1.msra.mxu0 0.0
  %728 = vmatprep.subr.mxu0 0.0
  %729 = vmatpush1.msra.mxu0 0.0
  %730 = vmatprep.subr.mxu0 0.0
  %731 = vmatpush1.msra.mxu0 0.0
  %732 = vmatprep.subr.mxu0 0.0
  %733 = vmatpush1.msra.mxu0 0.0
  %734 = vmatprep.subr.mxu0 0.0
  %735 = vmatpush1.msra.mxu0 0.0
  %736 = vmatprep.subr.mxu0 0.0
  %737 = vmatpush1.msra.mxu0 0.0
  %738 = vmatprep.subr.mxu0 0.0
  %739 = vmatpush1.msra.mxu0 0.0
  %740 = vmatprep.subr.mxu0 0.0
  %741 = vmatpush1.msra.mxu0 0.0
  %742 = vmatprep.subr.mxu0 0.0
  %743 = vmatpush1.msra.mxu0 0.0
  %744 = vmatprep.subr.mxu0 0.0
  %745 = vmatpush1.msra.mxu0 0.0
  %746 = vmatprep.subr.mxu0 0.0
  %747 = vmatpush1.msra.mxu0 0.0
  %748 = vmatprep.subr.mxu0 0.0
  %749 = vmatpush1.msra.mxu0 0.0
  %750 = vmatprep.subr.mxu0 0.0
  %751 = vmatpush1.msra.mxu0 0.0
  %752 = vmatprep.subr.mxu0 0.0
  %753 = vmatpush1.msra.mxu0 0.0
  %754 = vmatprep.subr.mxu0 0.0
  %755 = vmatpush1.msra.mxu0 0.0
  %756 = vmatprep.subr.mxu0 0.0
  %757 = vmatpush1.msra.mxu0 0.0
  %758 = vmatprep.subr.mxu0 0.0
  %759 = vmatpush1.msra.mxu0 0.0
  %760 = vmatprep.subr.mxu0 0.0
  %761 = vmatpush1.msra.mxu0 0.0
  %762 = vmatprep.subr.mxu0 0.0
  %763 = vmatpush1.msra.mxu0 0.0
  %764 = vmatprep.subr.mxu0 0.0
  %765 = vmatpush1.msra.mxu0 0.0
  %766 = vmatprep.subr.mxu0 0.0
  %767 = vmatpush1.msra.mxu0 0.0
  %768 = vmatprep.subr.mxu0 0.0
  %769 = vmatpush1.msra.mxu0 0.0
  %770 = vmatprep.subr.mxu0 0.0
  %771 = vmatpush1.msra.mxu0 0.0
  %772 = vmatprep.mubr.f32.mxu0 0.0
  %773 = vmatmul.mubr.f32.gmra.mrb[0].mxu0 %v706
  %v774 = vpop.f32.mrb[0].mxu0
  %v775 = vadd.f32 0.0, %v774
  %v776 = vpop.f32.mrb[0].mxu0
  %777 = vdwg.mxu0
  %v778 = vadd.f32 %v705, %v775
  %v779 = vxor.u32 %v778, 2147483648
  %v780 = vmul.f32 %v779, 1.442695
  %v781 = vpow.pop %v780
  %v782 = vadd.f32 %v781, 1.0
  %v783 = vrcp.pop %v782
  %v784 = vmul.f32 1.0, %v783
  %v785 = vtanh.pop %v778
  %v786 = vmul.f32 %v784, %v693
  %788 = vrot.lane.b32.xlu0 %v785, 64
  %v789 = vpop.permute.xlu0 %788
  %v791 = vmul.f32 %v784, %v789
  %793 = vrot.lane.b32.xlu0 %v791, 32
  %v794 = vpop.permute.xlu0 %793
  %v796 = vadd.f32 %v786, %v794
  %v797 = vtanh.pop %v796
  %799 = vrot.lane.b32.xlu0 %v797, 64
  %v800 = vpop.permute.xlu0 %799
  %v802 = vmul.f32 %v784, %v800
  %804 = vrot.lane.b32.xlu0 %v802, 32
  %v805 = vpop.permute.xlu0 %804
  %807 = vst.msk [vmem:[#allocation3 + $0x28] sm:$0xff] %vm189, %v805
  %v808 = vld [vmem:[#allocation2 + $0x30] sm:$0xff]
  %v809 = vsel %vm189, %v805, 0
  %811 = vmatprep.subr.mxu0 0.0
  %812 = vmatpush1.msra.mxu0 %v184
  %813 = vmatprep.subr.mxu0 0.0
  %814 = vmatpush1.msra.mxu0 %v185
  %815 = vmatprep.subr.mxu0 0.0
  %816 = vmatpush1.msra.mxu0 %v186
  %817 = vmatprep.subr.mxu0 0.0
  %818 = vmatpush1.msra.mxu0 %v187
  %819 = vmatprep.subr.mxu0 0.0
  %820 = vmatpush1.msra.mxu0 0.0
  %821 = vmatprep.subr.mxu0 0.0
  %822 = vmatpush1.msra.mxu0 0.0
  %823 = vmatprep.subr.mxu0 0.0
  %824 = vmatpush1.msra.mxu0 0.0
  %825 = vmatprep.subr.mxu0 0.0
  %826 = vmatpush1.msra.mxu0 0.0
  %827 = vmatprep.subr.mxu0 0.0
  %828 = vmatpush1.msra.mxu0 0.0
  %829 = vmatprep.subr.mxu0 0.0
  %830 = vmatpush1.msra.mxu0 0.0
  %831 = vmatprep.subr.mxu0 0.0
  %832 = vmatpush1.msra.mxu0 0.0
  %833 = vmatprep.subr.mxu0 0.0
  %834 = vmatpush1.msra.mxu0 0.0
  %835 = vmatprep.subr.mxu0 0.0
  %836 = vmatpush1.msra.mxu0 0.0
  %837 = vmatprep.subr.mxu0 0.0
  %838 = vmatpush1.msra.mxu0 0.0
  %839 = vmatprep.subr.mxu0 0.0
  %840 = vmatpush1.msra.mxu0 0.0
  %841 = vmatprep.subr.mxu0 0.0
  %842 = vmatpush1.msra.mxu0 0.0
  %843 = vmatprep.subr.mxu0 0.0
  %844 = vmatpush1.msra.mxu0 0.0
  %845 = vmatprep.subr.mxu0 0.0
  %846 = vmatpush1.msra.mxu0 0.0
  %847 = vmatprep.subr.mxu0 0.0
  %848 = vmatpush1.msra.mxu0 0.0
  %849 = vmatprep.subr.mxu0 0.0
  %850 = vmatpush1.msra.mxu0 0.0
  %851 = vmatprep.subr.mxu0 0.0
  %852 = vmatpush1.msra.mxu0 0.0
  %853 = vmatprep.subr.mxu0 0.0
  %854 = vmatpush1.msra.mxu0 0.0
  %855 = vmatprep.subr.mxu0 0.0
  %856 = vmatpush1.msra.mxu0 0.0
  %857 = vmatprep.subr.mxu0 0.0
  %858 = vmatpush1.msra.mxu0 0.0
  %859 = vmatprep.subr.mxu0 0.0
  %860 = vmatpush1.msra.mxu0 0.0
  %861 = vmatprep.subr.mxu0 0.0
  %862 = vmatpush1.msra.mxu0 0.0
  %863 = vmatprep.subr.mxu0 0.0
  %864 = vmatpush1.msra.mxu0 0.0
  %865 = vmatprep.subr.mxu0 0.0
  %866 = vmatpush1.msra.mxu0 0.0
  %867 = vmatprep.subr.mxu0 0.0
  %868 = vmatpush1.msra.mxu0 0.0
  %869 = vmatprep.subr.mxu0 0.0
  %870 = vmatpush1.msra.mxu0 0.0
  %871 = vmatprep.subr.mxu0 0.0
  %872 = vmatpush1.msra.mxu0 0.0
  %873 = vmatprep.subr.mxu0 0.0
  %874 = vmatpush1.msra.mxu0 0.0
  %875 = vmatprep.mubr.f32.mxu0 0.0
  %876 = vmatmul.mubr.f32.gmra.mrb[0].mxu0 %v809
  %v877 = vpop.f32.mrb[0].mxu0
  %v878 = vadd.f32 0.0, %v877
  %v879 = vpop.f32.mrb[0].mxu0
  %880 = vdwg.mxu0
  %v881 = vadd.f32 %v808, %v878
  %v882 = vxor.u32 %v881, 2147483648
  %v883 = vmul.f32 %v882, 1.442695
  %v884 = vpow.pop %v883
  %v885 = vadd.f32 %v884, 1.0
  %v886 = vrcp.pop %v885
  %v887 = vmul.f32 1.0, %v886
  %v888 = vtanh.pop %v881
  %v889 = vmul.f32 %v887, %v796
  %891 = vrot.lane.b32.xlu0 %v888, 64
  %v892 = vpop.permute.xlu0 %891
  %v894 = vmul.f32 %v887, %v892
  %896 = vrot.lane.b32.xlu0 %v894, 32
  %v897 = vpop.permute.xlu0 %896
  %v899 = vadd.f32 %v889, %v897
  %v900 = vtanh.pop %v899
  %902 = vrot.lane.b32.xlu0 %v900, 64
  %v903 = vpop.permute.xlu0 %902
  %v905 = vmul.f32 %v887, %v903
  %907 = vrot.lane.b32.xlu0 %v905, 32
  %v908 = vpop.permute.xlu0 %907
  %910 = vst.msk [vmem:[#allocation3 + $0x30] sm:$0xff] %vm189, %v908
  %v911 = vld [vmem:[#allocation2 + $0x38] sm:$0xff]
  %v912 = vsel %vm189, %v908, 0
  %914 = vmatprep.subr.mxu0 0.0
  %915 = vmatpush1.msra.mxu0 %v184
  %916 = vmatprep.subr.mxu0 0.0
  %917 = vmatpush1.msra.mxu0 %v185
  %918 = vmatprep.subr.mxu0 0.0
  %919 = vmatpush1.msra.mxu0 %v186
  %920 = vmatprep.subr.mxu0 0.0
  %921 = vmatpush1.msra.mxu0 %v187
  %922 = vmatprep.subr.mxu0 0.0
  %923 = vmatpush1.msra.mxu0 0.0
  %924 = vmatprep.subr.mxu0 0.0
  %925 = vmatpush1.msra.mxu0 0.0
  %926 = vmatprep.subr.mxu0 0.0
  %927 = vmatpush1.msra.mxu0 0.0
  %928 = vmatprep.subr.mxu0 0.0
  %929 = vmatpush1.msra.mxu0 0.0
  %930 = vmatprep.subr.mxu0 0.0
  %931 = vmatpush1.msra.mxu0 0.0
  %932 = vmatprep.subr.mxu0 0.0
  %933 = vmatpush1.msra.mxu0 0.0
  %934 = vmatprep.subr.mxu0 0.0
  %935 = vmatpush1.msra.mxu0 0.0
  %936 = vmatprep.subr.mxu0 0.0
  %937 = vmatpush1.msra.mxu0 0.0
  %938 = vmatprep.subr.mxu0 0.0
  %939 = vmatpush1.msra.mxu0 0.0
  %940 = vmatprep.subr.mxu0 0.0
  %941 = vmatpush1.msra.mxu0 0.0
  %942 = vmatprep.subr.mxu0 0.0
  %943 = vmatpush1.msra.mxu0 0.0
  %944 = vmatprep.subr.mxu0 0.0
  %945 = vmatpush1.msra.mxu0 0.0
  %946 = vmatprep.subr.mxu0 0.0
  %947 = vmatpush1.msra.mxu0 0.0
  %948 = vmatprep.subr.mxu0 0.0
  %949 = vmatpush1.msra.mxu0 0.0
  %950 = vmatprep.subr.mxu0 0.0
  %951 = vmatpush1.msra.mxu0 0.0
  %952 = vmatprep.subr.mxu0 0.0
  %953 = vmatpush1.msra.mxu0 0.0
  %954 = vmatprep.subr.mxu0 0.0
  %955 = vmatpush1.msra.mxu0 0.0
  %956 = vmatprep.subr.mxu0 0.0
  %957 = vmatpush1.msra.mxu0 0.0
  %958 = vmatprep.subr.mxu0 0.0
  %959 = vmatpush1.msra.mxu0 0.0
  %960 = vmatprep.subr.mxu0 0.0
  %961 = vmatpush1.msra.mxu0 0.0
  %962 = vmatprep.subr.mxu0 0.0
  %963 = vmatpush1.msra.mxu0 0.0
  %964 = vmatprep.subr.mxu0 0.0
  %965 = vmatpush1.msra.mxu0 0.0
  %966 = vmatprep.subr.mxu0 0.0
  %967 = vmatpush1.msra.mxu0 0.0
  %968 = vmatprep.subr.mxu0 0.0
  %969 = vmatpush1.msra.mxu0 0.0
  %970 = vmatprep.subr.mxu0 0.0
  %971 = vmatpush1.msra.mxu0 0.0
  %972 = vmatprep.subr.mxu0 0.0
  %973 = vmatpush1.msra.mxu0 0.0
  %974 = vmatprep.subr.mxu0 0.0
  %975 = vmatpush1.msra.mxu0 0.0
  %976 = vmatprep.subr.mxu0 0.0
  %977 = vmatpush1.msra.mxu0 0.0
  %978 = vmatprep.mubr.f32.mxu0 0.0
  %979 = vmatmul.mubr.f32.gmra.mrb[0].mxu0 %v912
  %v980 = vpop.f32.mrb[0].mxu0
  %v981 = vadd.f32 0.0, %v980
  %v982 = vpop.f32.mrb[0].mxu0
  %983 = vdwg.mxu0
  %v984 = vadd.f32 %v911, %v981
  %v985 = vxor.u32 %v984, 2147483648
  %v986 = vmul.f32 %v985, 1.442695
  %v987 = vpow.pop %v986
  %v988 = vadd.f32 %v987, 1.0
  %v989 = vrcp.pop %v988
  %v990 = vmul.f32 1.0, %v989
  %v991 = vtanh.pop %v984
  %v992 = vmul.f32 %v990, %v899
  %994 = vrot.lane.b32.xlu0 %v991, 64
  %v995 = vpop.permute.xlu0 %994
  %v997 = vmul.f32 %v990, %v995
  %999 = vrot.lane.b32.xlu0 %v997, 32
  %v1000 = vpop.permute.xlu0 %999
  %v1002 = vadd.f32 %v992, %v1000
  %v1003 = vtanh.pop %v1002
  %1005 = vrot.lane.b32.xlu0 %v1003, 64
  %v1006 = vpop.permute.xlu0 %1005
  %v1008 = vmul.f32 %v990, %v1006
  %1010 = vrot.lane.b32.xlu0 %v1008, 32
  %v1011 = vpop.permute.xlu0 %1010
  %1013 = vst.msk [vmem:[#allocation3 + $0x38] sm:$0xff] %vm189, %v1011
  %v1014 = vld [vmem:[#allocation3] sm:$0xff]
  %v1015 = vld [vmem:[#allocation3 + $0x8] sm:$0xff]
  %v1016 = vld [vmem:[#allocation3 + $0x10] sm:$0xff]
  %v1017 = vld [vmem:[#allocation3 + $0x18] sm:$0xff]
  %v1018 = vld [vmem:[#allocation3 + $0x20] sm:$0xff]
  %v1019 = vld [vmem:[#allocation3 + $0x28] sm:$0xff]
  %v1020 = vld [vmem:[#allocation3 + $0x30] sm:$0xff]
  %v1021 = vld [vmem:[#allocation3 + $0x38] sm:$0xff]
  %v1022 = vld [vmem:[%s4] sm:$0xff]
  %v1023 = vld [vmem:[%s4 + $0x8] sm:$0xff]
  %v1024 = vld [vmem:[%s4 + $0x10] sm:$0xff]
  %v1025 = vld [vmem:[%s4 + $0x18] sm:$0xff]
  %v1026 = vld [vmem:[%s5] sm:$0x1]
  %v1028 = vlaneseq
  %v1029 = vshrl.u32 %v1028, 7
  %v1030 = vsub.s32 0, %v1029
  %v1031 = vrot.slane %v1026, %v1030
  %v1034 = vsel %vm189, %v1014, 0
  %v1037 = vsel %vm189, %v1015, 0
  %v1040 = vsel %vm189, %v1016, 0
  %v1043 = vsel %vm189, %v1017, 0
  %v1046 = vsel %vm189, %v1018, 0
  %v1049 = vsel %vm189, %v1019, 0
  %v1052 = vsel %vm189, %v1020, 0
  %v1055 = vsel %vm189, %v1021, 0
  %1057 = vmatprep.subr.mxu0 0.0
  %1058 = vmatpush1.msra.mxu0 %v1022
  %1059 = vmatprep.subr.mxu0 0.0
  %1060 = vmatpush1.msra.mxu0 %v1023
  %1061 = vmatprep.subr.mxu0 0.0
  %1062 = vmatpush1.msra.mxu0 %v1024
  %1063 = vmatprep.subr.mxu0 0.0
  %1064 = vmatpush1.msra.mxu0 %v1025
  %1065 = vmatprep.subr.mxu0 0.0
  %1066 = vmatpush1.msra.mxu0 0.0
  %1067 = vmatprep.subr.mxu0 0.0
  %1068 = vmatpush1.msra.mxu0 0.0
  %1069 = vmatprep.subr.mxu0 0.0
  %1070 = vmatpush1.msra.mxu0 0.0
  %1071 = vmatprep.subr.mxu0 0.0
  %1072 = vmatpush1.msra.mxu0 0.0
  %1073 = vmatprep.subr.mxu0 0.0
  %1074 = vmatpush1.msra.mxu0 0.0
  %1075 = vmatprep.subr.mxu0 0.0
  %1076 = vmatpush1.msra.mxu0 0.0
  %1077 = vmatprep.subr.mxu0 0.0
  %1078 = vmatpush1.msra.mxu0 0.0
  %1079 = vmatprep.subr.mxu0 0.0
  %1080 = vmatpush1.msra.mxu0 0.0
  %1081 = vmatprep.subr.mxu0 0.0
  %1082 = vmatpush1.msra.mxu0 0.0
  %1083 = vmatprep.subr.mxu0 0.0
  %1084 = vmatpush1.msra.mxu0 0.0
  %1085 = vmatprep.subr.mxu0 0.0
  %1086 = vmatpush1.msra.mxu0 0.0
  %1087 = vmatprep.subr.mxu0 0.0
  %1088 = vmatpush1.msra.mxu0 0.0
  %1089 = vmatprep.subr.mxu0 0.0
  %1090 = vmatpush1.msra.mxu0 0.0
  %1091 = vmatprep.subr.mxu0 0.0
  %1092 = vmatpush1.msra.mxu0 0.0
  %1093 = vmatprep.subr.mxu0 0.0
  %1094 = vmatpush1.msra.mxu0 0.0
  %1095 = vmatprep.subr.mxu0 0.0
  %1096 = vmatpush1.msra.mxu0 0.0
  %1097 = vmatprep.subr.mxu0 0.0
  %1098 = vmatpush1.msra.mxu0 0.0
  %1099 = vmatprep.subr.mxu0 0.0
  %1100 = vmatpush1.msra.mxu0 0.0
  %1101 = vmatprep.subr.mxu0 0.0
  %1102 = vmatpush1.msra.mxu0 0.0
  %1103 = vmatprep.subr.mxu0 0.0
  %1104 = vmatpush1.msra.mxu0 0.0
  %1105 = vmatprep.subr.mxu0 0.0
  %1106 = vmatpush1.msra.mxu0 0.0
  %1107 = vmatprep.subr.mxu0 0.0
  %1108 = vmatpush1.msra.mxu0 0.0
  %1109 = vmatprep.subr.mxu0 0.0
  %1110 = vmatpush1.msra.mxu0 0.0
  %1111 = vmatprep.subr.mxu0 0.0
  %1112 = vmatpush1.msra.mxu0 0.0
  %1113 = vmatprep.subr.mxu0 0.0
  %1114 = vmatpush1.msra.mxu0 0.0
  %1115 = vmatprep.subr.mxu0 0.0
  %1116 = vmatpush1.msra.mxu0 0.0
  %1117 = vmatprep.subr.mxu0 0.0
  %1118 = vmatpush1.msra.mxu0 0.0
  %1119 = vmatprep.subr.mxu0 0.0
  %1120 = vmatpush1.msra.mxu0 0.0
  %1121 = vmatprep.mubr.f32.mxu0 0.0
  %1122 = vmatmul.mubr.f32.gmra.mrb[0].mxu0 %v1034
  %v1123 = vpop.f32.mrb[0].mxu0
  %v1124 = vadd.f32 %v1031, %v1123
  %v1125 = vpop.f32.mrb[0].mxu0
  %1126 = vmatprep.mubr.f32.mxu0 0.0
  %1127 = vmatmul.mubr.f32.gmra.mrb[0].mxu0 %v1037
  %v1128 = vpop.f32.mrb[0].mxu0
  %v1129 = vadd.f32 %v1031, %v1128
  %v1130 = vpop.f32.mrb[0].mxu0
  %1131 = vmatprep.mubr.f32.mxu0 0.0
  %1132 = vmatmul.mubr.f32.gmra.mrb[0].mxu0 %v1040
  %v1133 = vpop.f32.mrb[0].mxu0
  %v1134 = vadd.f32 %v1031, %v1133
  %v1135 = vpop.f32.mrb[0].mxu0
  %1136 = vmatprep.mubr.f32.mxu0 0.0
  %1137 = vmatmul.mubr.f32.gmra.mrb[0].mxu0 %v1043
  %v1138 = vpop.f32.mrb[0].mxu0
  %v1139 = vadd.f32 %v1031, %v1138
  %v1140 = vpop.f32.mrb[0].mxu0
  %1141 = vmatprep.mubr.f32.mxu0 0.0
  %1142 = vmatmul.mubr.f32.gmra.mrb[0].mxu0 %v1046
  %v1143 = vpop.f32.mrb[0].mxu0
  %v1144 = vadd.f32 %v1031, %v1143
  %v1145 = vpop.f32.mrb[0].mxu0
  %1146 = vmatprep.mubr.f32.mxu0 0.0
  %1147 = vmatmul.mubr.f32.gmra.mrb[0].mxu0 %v1049
  %v1148 = vpop.f32.mrb[0].mxu0
  %v1149 = vadd.f32 %v1031, %v1148
  %v1150 = vpop.f32.mrb[0].mxu0
  %1151 = vmatprep.mubr.f32.mxu0 0.0
  %1152 = vmatmul.mubr.f32.gmra.mrb[0].mxu0 %v1052
  %v1153 = vpop.f32.mrb[0].mxu0
  %v1154 = vadd.f32 %v1031, %v1153
  %v1155 = vpop.f32.mrb[0].mxu0
  %1156 = vmatprep.mubr.f32.mxu0 0.0
  %1157 = vmatmul.mubr.f32.gmra.mrb[0].mxu0 %v1055
  %v1158 = vpop.f32.mrb[0].mxu0
  %v1159 = vadd.f32 %v1031, %v1158
  %v1160 = vpop.f32.mrb[0].mxu0
  %1161 = vdwg.mxu0
  %1162 = vst [vmem:[%s6] sm:$0xff] %v1124
  %1163 = vst [vmem:[%s6 + $0x8] sm:$0xff] %v1129
  %1164 = vst [vmem:[%s6 + $0x10] sm:$0xff] %v1134
  %1165 = vst [vmem:[%s6 + $0x18] sm:$0xff] %v1139
  %1166 = vst [vmem:[%s6 + $0x20] sm:$0xff] %v1144
  %1167 = vst [vmem:[%s6 + $0x28] sm:$0xff] %v1149
  %1168 = vst [vmem:[%s6 + $0x30] sm:$0xff] %v1154
  %1169 = vst [vmem:[%s6 + $0x38] sm:$0xff] %v1159
  %1170 = vst.msk [vmem:[%s7] sm:$0xff] %vm189, %v1011
  %1172 = vrot.lane.b32.xlu0 %v1002, 96
  %v1173 = vpop.permute.xlu0 %1172
  %1175 = vst.msk [vmem:[%s8] sm:$0xff] %vm189, %v1173
  // Predicated region
  $region26: #{critic_forward.1} parent=0 // pred_check
    _
  $region27: #{critic_forward.1} parent=0 // pred_check_branch
    %1177 = sbr.rel (0) target = $region29
  $region28: #{critic_forward.1} parent=0 // pred_region
    _
  $region29: #{critic_forward.1} parent=0 // pred_fallthru
    _
  // Predicated region
  $region30: #{critic_forward.1} parent=0 // pred_check
    _
  $region31: #{critic_forward.1} parent=0 // pred_check_branch
    %1179 = sbr.rel (0) target = $region33
  $region32: #{critic_forward.1} parent=0 // pred_region
    _
  $region33: #{critic_forward.1} parent=0 // pred_fallthru
    _
  // Predicated region
  $region34: #{critic_forward.1} parent=0 // pred_check
    _
  $region35: #{critic_forward.1} parent=0 // pred_check_branch
    %1181 = sbr.rel (0) target = $region37
  $region36: #{critic_forward.1} parent=0 // pred_region
    _
  $region37: #{critic_forward.1} parent=0 // pred_fallthru
    _
  // Predicated region
  $region38: #{critic_forward.1} parent=0 // pred_check
    _
  $region39: #{critic_forward.1} parent=0 // pred_check_branch
    %1183 = sbr.rel (0) target = $region41
  $region40: #{critic_forward.1} parent=0 // pred_region
    _
  $region41: #{critic_forward.1} parent=0 // pred_fallthru
    _
  // Predicated region
  $region42: #{critic_forward.1} parent=0 // pred_check
    _
  $region43: #{critic_forward.1} parent=0 // pred_check_branch
    %1185 = sbr.rel (0) target = $region45
  $region44: #{critic_forward.1} parent=0 // pred_region
    _
  $region45: #{critic_forward.1} parent=0 // pred_fallthru
    _
  // Predicated region
  $region46: #{critic_forward.1} parent=0 // pred_check
    _
  $region47: #{critic_forward.1} parent=0 // pred_check_branch
    %1187 = sbr.rel (0) target = $region49
  $region48: #{critic_forward.1} parent=0 // pred_region
    _
  $region49: #{critic_forward.1} parent=0 // pred_fallthru
    _

</llo_original>
